<compile_context>
chip_gen: v6e
topology: v6e:2x2x1
jax: 0.10.0
libtpu: 0.0.40
codegen_flags: <defaults>
</compile_context>

<pallas_src>
import functools

import jax
import jax.numpy as jnp
from jax.experimental import pallas as pl
from jax.experimental.pallas import tpu as pltpu


def _double_conv_kernel(x_ref, w1_ref, b1_ref, w2_ref, b2_ref, out_ref,
                        xpad_ref, hpad_ref, *, H, W, Cin, Cout, NB):
    """Fused (conv3x3 + BN + ReLU) x 2 for NB batch images.

    x_ref:    (NB, H, W*Cin)          input, lane-fused W*C layout
    w1_ref:   (3, W*Cin,  W*Cout)     conv1 banded weights (one band per dy)
    w2_ref:   (3, W*Cout, W*Cout)     conv2 banded weights
    b*_ref:   (1, W*Cout)             folded conv-bias + BN shift, tiled over W
    out_ref:  (NB, H, W*Cout)         lane-dense output slab
    xpad_ref: (NB, H+2, W*Cin)        VMEM scratch, H halo rows only
    hpad_ref: (NB, H+2, W*Cout)       VMEM scratch for the intermediate h
    """
    # Zero ONLY the two H-halo rows (W-edge padding is encoded in the banded
    # weights, so there are no W halo columns).  Re-zeroed every step for
    # megacore safety (see module comment); cheap: 4 one-row stores.
    xpad_ref[:, 0:1, :] = jnp.zeros((NB, 1, W * Cin), jnp.float32)
    xpad_ref[:, H + 1:H + 2, :] = jnp.zeros((NB, 1, W * Cin), jnp.float32)
    hpad_ref[:, 0:1, :] = jnp.zeros((NB, 1, W * Cout), jnp.float32)
    hpad_ref[:, H + 1:H + 2, :] = jnp.zeros((NB, 1, W * Cout), jnp.float32)

    # Interior rows for all NB images: one aligned, lane-offset-free store.
    xpad_ref[:, 1:H + 1, :] = x_ref[...]

    def conv_bn_relu(pad_ref, w_ref, b_ref, b):
        # Three banded matmuls, one per dy row tap.  dx taps + folded BN scale
        # live inside the banded weights: no im2col patches, no lane shifts.
        acc = jnp.dot(pad_ref[b, 0:H, :], w_ref[0],
                      preferred_element_type=jnp.float32)
        acc += jnp.dot(pad_ref[b, 1:H + 1, :], w_ref[1],
                       preferred_element_type=jnp.float32)
        acc += jnp.dot(pad_ref[b, 2:H + 2, :], w_ref[2],
                       preferred_element_type=jnp.float32)
        return jnp.maximum(acc + b_ref[...], 0.0)        # (H, W*Cout), f32

    for b in range(NB):                                   # small & static: unrolled
        h = conv_bn_relu(xpad_ref, w1_ref, b1_ref, b)
        # Intermediate never leaves VMEM and is already in the fused
        # (H, W*Cout) layout the matmul produced — no repack between stages.
        hpad_ref[b, 1:H + 1, :] = h
        y = conv_bn_relu(hpad_ref, w2_ref, b2_ref, b)
        out_ref[b] = y.astype(out_ref.dtype)              # lane-dense store


def _pick_nb(n, max_nb=8):
    """Largest divisor of n that is <= max_nb (images per grid step)."""
    nb = 1
    for d in range(1, min(n, max_nb) + 1):
        if n % d == 0:
            nb = d
    return nb


def double_conv_pallas(x_fused, w1, b1, w2, b2, *, H, W, Cin, Cout):
    """x_fused: (N, H, W*Cin); w1: (3, W*Cin, W*Cout); w2: (3, W*Cout, W*Cout)."""
    N = x_fused.shape[0]
    NB = _pick_nb(N)

    kernel = functools.partial(_double_conv_kernel,
                               H=H, W=W, Cin=Cin, Cout=Cout, NB=NB)

    # Explicit VMEM budget: double-buffered I/O blocks + resident weights +
    # scratch, 2x headroom for compiler-internal scratch, capped well below
    # v7x's 64 MiB physical per-core VMEM (and >= v5e's 16 MiB scoped default).
    itemsize = 4
    io_bytes = NB * H * W * (Cin + Cout) * itemsize
    w_bytes = (3 * W * Cin * W * Cout + 3 * W * Cout * W * Cout
               + 2 * W * Cout) * itemsize
    scratch_bytes = NB * (H + 2) * W * (Cin + Cout) * itemsize
    vmem_limit = int(min(max(2 * (2 * io_bytes + w_bytes + scratch_bytes),
                             16 * 1024 * 1024), 48 * 1024 * 1024))

    out = pl.pallas_call(
        kernel,
        out_shape=jax.ShapeDtypeStruct((N, H, W * Cout), jnp.float32),
        grid_spec=pltpu.PrefetchScalarGridSpec(
            num_scalar_prefetch=0,
            grid=(N // NB,),
            in_specs=[
                pl.BlockSpec((NB, H, W * Cin), lambda n: (n, 0, 0)),
                pl.BlockSpec((3, W * Cin, W * Cout), lambda n: (0, 0, 0)),
                pl.BlockSpec((1, W * Cout), lambda n: (0, 0)),
                pl.BlockSpec((3, W * Cout, W * Cout), lambda n: (0, 0, 0)),
                pl.BlockSpec((1, W * Cout), lambda n: (0, 0)),
            ],
            out_specs=pl.BlockSpec((NB, H, W * Cout), lambda n: (n, 0, 0)),
            scratch_shapes=[
                pltpu.VMEM((NB, H + 2, W * Cin), jnp.float32),
                pltpu.VMEM((NB, H + 2, W * Cout), jnp.float32),
            ],
        ),
        compiler_params=pltpu.CompilerParams(
            dimension_semantics=("parallel",),
            vmem_limit_bytes=vmem_limit,
        ),
    )(x_fused, w1, b1, w2, b2)

    return out


def _to_banded(w_oihw, scale, W):
    """OIHW conv3x3 weights (+ folded BN scale) -> (3, W*Cin, W*Cout) banded.

    banded[dy, wi*Cin + ci, w*Cout + co] = scale[co] * w[co, ci, dy, wi-w+1]
    when 0 <= wi-w+1 <= 2, else 0.  The band structure implements both the dx
    taps and the zero padding at the left/right image edges.
    """
    Cout, Cin, _, _ = w_oihw.shape
    w_s = jnp.transpose(w_oihw * scale[:, None, None, None],
                        (2, 3, 1, 0))                       # (dy, dx, ci, co)
    wi = jnp.arange(W)[:, None]
    w = jnp.arange(W)[None, :]
    dx = wi - w + 1                                          # (W, W)
    valid = (dx >= 0) & (dx <= 2)
    vals = w_s[:, jnp.clip(dx, 0, 2), :, :]                  # (3, W, W, Cin, Cout)
    vals = jnp.where(valid[None, :, :, None, None], vals, 0.0)
    return jnp.transpose(vals, (0, 1, 3, 2, 4)).reshape(3, W * Cin, W * Cout)


def init_double_conv_params(key, in_channel, out_channel, W, batch_norm=True):
    """Deterministic synthetic params matching nn.Conv2d / nn.BatchNorm2d shapes."""
    k1, k2, k3, k4 = jax.random.split(key, 4)
    w1_oihw = jax.random.normal(k1, (out_channel, in_channel, 3, 3), jnp.float32) * 0.1
    b1 = jax.random.normal(k2, (out_channel,), jnp.float32) * 0.1
    w2_oihw = jax.random.normal(k3, (out_channel, out_channel, 3, 3), jnp.float32) * 0.1
    b2 = jax.random.normal(k4, (out_channel,), jnp.float32) * 0.1

    eps = 1e-5

    def bn_scale_shift():
        if batch_norm:
            gamma = jnp.ones((out_channel,), jnp.float32)
            beta = jnp.zeros((out_channel,), jnp.float32)
            rmean = jnp.zeros((out_channel,), jnp.float32)
            rvar = jnp.ones((out_channel,), jnp.float32)
            s = gamma / jnp.sqrt(rvar + eps)
            t = beta - rmean * s
        else:
            s = jnp.ones((out_channel,), jnp.float32)
            t = jnp.zeros((out_channel,), jnp.float32)
        return s, t

    s1, t1 = bn_scale_shift()   # each BN layer folded independently
    s2, t2 = bn_scale_shift()

    return {
        # kernel-ready params: BN scale folded into banded weights, bias tiled
        "w1": _to_banded(w1_oihw, s1, W),
        "b1": jnp.tile(b1 * s1 + t1, W).reshape(1, W * out_channel),
        "w2": _to_banded(w2_oihw, s2, W),
        "b2": jnp.tile(b2 * s2 + t2, W).reshape(1, W * out_channel),
        # raw params kept for the pure-JAX reference check
        "_w1_oihw": w1_oihw, "_b1": b1, "_w2_oihw": w2_oihw, "_b2": b2,
        "_bn1": (s1, t1), "_bn2": (s2, t2),
    }


@jax.jit
def double_convolution_block(x_nchw, w1, b1, w2, b2):
    """Forward pass of DoubleConvolutionBlock. Input/output are NCHW like PyTorch."""
    N, Cin, H, W = x_nchw.shape
    Cout = b1.shape[-1] // W
    # NCHW -> NHWC once at the block boundary, then fuse W and C onto lanes.
    x = jnp.transpose(x_nchw, (0, 2, 3, 1)).reshape(N, H, W * Cin)
    y = double_conv_pallas(x, w1, b1, w2, b2, H=H, W=W, Cin=Cin, Cout=Cout)
    return jnp.transpose(y.reshape(N, H, W, Cout), (0, 3, 1, 2))


def _reference(x_nchw, p):
    """Pure-JAX reference (lax conv, NCHW) for correctness checking."""
    def conv(x, w, b):
        out = jax.lax.conv_general_dilated(
            x, w, window_strides=(1, 1), padding="SAME",
            dimension_numbers=("NCHW", "OIHW", "NCHW"))
        return out + b.reshape(1, -1, 1, 1)

    s1, t1 = p["_bn1"]
    s2, t2 = p["_bn2"]
    h = jnp.maximum(conv(x_nchw, p["_w1_oihw"], p["_b1"])
                    * s1.reshape(1, -1, 1, 1) + t1.reshape(1, -1, 1, 1), 0.0)
    y = jnp.maximum(conv(h, p["_w2_oihw"], p["_b2"])
                    * s2.reshape(1, -1, 1, 1) + t2.reshape(1, -1, 1, 1), 0.0)
    return y


if __name__ == "__main__":
    N, Cin, Cout, HW = 2, 4, 8, 16
    key = jax.random.PRNGKey(0)
    kx, kp = jax.random.split(key)
    x = jax.random.normal(kx, (N, Cin, HW, HW), jnp.float32)   # NCHW like PyTorch
    params = init_double_conv_params(kp, Cin, Cout, W=HW, batch_norm=True)

    out = double_convolution_block(
        x, params["w1"], params["b1"], params["w2"], params["b2"])
    out = jax.block_until_ready(out)

    ref = _reference(x, params)
    assert out.shape == (N, Cout, HW, HW), out.shape
    err = float(jnp.max(jnp.abs(out - ref)))
    assert jnp.allclose(out, ref, atol=1e-4, rtol=1e-4), err

    print("KERNEL_OK")
</pallas_src>

<mosaic_0001>
module attributes {stable_mosaic.version = 11 : i64} {
  func.func @_double_conv_kernel(%arg0: i32, %arg1: memref<2x16x64xf32, #tpu.memory_space<vmem>>, %arg2: memref<3x64x128xf32, #tpu.memory_space<vmem>>, %arg3: memref<1x128xf32, #tpu.memory_space<vmem>>, %arg4: memref<3x128x128xf32, #tpu.memory_space<vmem>>, %arg5: memref<1x128xf32, #tpu.memory_space<vmem>>, %arg6: memref<2x16x128xf32, #tpu.memory_space<vmem>>, %arg7: memref<2x18x64xf32, #tpu.memory_space<vmem>>, %arg8: memref<2x18x128xf32, #tpu.memory_space<vmem>>) attributes {dimension_semantics = [#tpu.dimension_semantics<parallel>], iteration_bounds = array<i64: 1>, scalar_prefetch = 0 : i64, scratch_operands = 2 : i64, tpu.core_type = #tpu.core_type<tc>, window_params = [{transform_indices = @transform_0, window_bounds = array<i64: 2, 16, 64>}, {pipeline_mode = #tpu.pipeline_mode<synchronous>, transform_indices = @transform_1, window_bounds = array<i64: 3, 64, 128>}, {pipeline_mode = #tpu.pipeline_mode<synchronous>, transform_indices = @transform_2, window_bounds = array<i64: 1, 128>}, {pipeline_mode = #tpu.pipeline_mode<synchronous>, transform_indices = @transform_3, window_bounds = array<i64: 3, 128, 128>}, {pipeline_mode = #tpu.pipeline_mode<synchronous>, transform_indices = @transform_4, window_bounds = array<i64: 1, 128>}, {transform_indices = @transform_5, window_bounds = array<i64: 2, 16, 128>}]} {
    %cst = arith.constant 0.000000e+00 : f32
    %0 = vector.broadcast %cst : f32 to vector<2x1x64xf32>
    %c0 = arith.constant 0 : index
    %c0_0 = arith.constant 0 : index
    %c0_1 = arith.constant 0 : index
    %1 = vector.load %arg7[%c0, %c0_0, %c0_1] : memref<2x18x64xf32, #tpu.memory_space<vmem>>, vector<2x1x64xf32>
    tpu.vector_store %arg7[%c0, %c0_0, %c0_1], %0 {strides = array<i32>} : memref<2x18x64xf32, #tpu.memory_space<vmem>>, vector<2x1x64xf32>,
    %cst_2 = arith.constant 0.000000e+00 : f32
    %2 = vector.broadcast %cst_2 : f32 to vector<2x1x64xf32>
    %c0_3 = arith.constant 0 : index
    %c17 = arith.constant 17 : index
    %c0_4 = arith.constant 0 : index
    %3 = vector.load %arg7[%c0_3, %c17, %c0_4] : memref<2x18x64xf32, #tpu.memory_space<vmem>>, vector<2x1x64xf32>
    tpu.vector_store %arg7[%c0_3, %c17, %c0_4], %2 {strides = array<i32>} : memref<2x18x64xf32, #tpu.memory_space<vmem>>, vector<2x1x64xf32>,
    %cst_5 = arith.constant 0.000000e+00 : f32
    %4 = vector.broadcast %cst_5 : f32 to vector<2x1x128xf32>
    %c0_6 = arith.constant 0 : index
    %c0_7 = arith.constant 0 : index
    %c0_8 = arith.constant 0 : index
    %5 = vector.load %arg8[%c0_6, %c0_7, %c0_8] : memref<2x18x128xf32, #tpu.memory_space<vmem>>, vector<2x1x128xf32>
    tpu.vector_store %arg8[%c0_6, %c0_7, %c0_8], %4 {strides = array<i32>} : memref<2x18x128xf32, #tpu.memory_space<vmem>>, vector<2x1x128xf32>,
    %cst_9 = arith.constant 0.000000e+00 : f32
    %6 = vector.broadcast %cst_9 : f32 to vector<2x1x128xf32>
    %c0_10 = arith.constant 0 : index
    %c17_11 = arith.constant 17 : index
    %c0_12 = arith.constant 0 : index
    %7 = vector.load %arg8[%c0_10, %c17_11, %c0_12] : memref<2x18x128xf32, #tpu.memory_space<vmem>>, vector<2x1x128xf32>
    tpu.vector_store %arg8[%c0_10, %c17_11, %c0_12], %6 {strides = array<i32>} : memref<2x18x128xf32, #tpu.memory_space<vmem>>, vector<2x1x128xf32>,
    %c0_13 = arith.constant 0 : index
    %c0_14 = arith.constant 0 : index
    %c0_15 = arith.constant 0 : index
    %8 = vector.load %arg1[%c0_13, %c0_14, %c0_15] : memref<2x16x64xf32, #tpu.memory_space<vmem>>, vector<2x16x64xf32>
    %c0_16 = arith.constant 0 : index
    %c1 = arith.constant 1 : index
    %c0_17 = arith.constant 0 : index
    %9 = vector.load %arg7[%c0_16, %c1, %c0_17] : memref<2x18x64xf32, #tpu.memory_space<vmem>>, vector<2x16x64xf32>
    tpu.vector_store %arg7[%c0_16, %c1, %c0_17], %8 {strides = array<i32>} : memref<2x18x64xf32, #tpu.memory_space<vmem>>, vector<2x16x64xf32>,
    %c0_18 = arith.constant 0 : index
    %c0_19 = arith.constant 0 : index
    %c0_20 = arith.constant 0 : index
    %10 = vector.load %arg7[%c0_18, %c0_19, %c0_20] : memref<2x18x64xf32, #tpu.memory_space<vmem>>, vector<1x16x64xf32>
    %11 = vector.shape_cast %10 : vector<1x16x64xf32> to vector<16x64xf32>
    %c0_21 = arith.constant 0 : index
    %c0_22 = arith.constant 0 : index
    %c0_23 = arith.constant 0 : index
    %12 = vector.load %arg2[%c0_21, %c0_22, %c0_23] : memref<3x64x128xf32, #tpu.memory_space<vmem>>, vector<1x64x128xf32>
    %13 = vector.shape_cast %12 : vector<1x64x128xf32> to vector<64x128xf32>
    %cst_24 = arith.constant dense<0.000000e+00> : vector<16x128xf32>
    %14 = tpu.matmul %11, %13, %cst_24 {dimension_numbers = #tpu.dot_dimension_numbers<[1], [0], [0], [1], [0, 0, 1, 1], [], []>} : vector<16x64xf32>, vector<64x128xf32>, vector<16x128xf32> -> vector<16x128xf32>
    %c0_25 = arith.constant 0 : index
    %c1_26 = arith.constant 1 : index
    %c0_27 = arith.constant 0 : index
    %15 = vector.load %arg7[%c0_25, %c1_26, %c0_27] : memref<2x18x64xf32, #tpu.memory_space<vmem>>, vector<1x16x64xf32>
    %16 = vector.shape_cast %15 : vector<1x16x64xf32> to vector<16x64xf32>
    %c1_28 = arith.constant 1 : index
    %c0_29 = arith.constant 0 : index
    %c0_30 = arith.constant 0 : index
    %17 = vector.load %arg2[%c1_28, %c0_29, %c0_30] : memref<3x64x128xf32, #tpu.memory_space<vmem>>, vector<1x64x128xf32>
    %18 = vector.shape_cast %17 : vector<1x64x128xf32> to vector<64x128xf32>
    %cst_31 = arith.constant dense<0.000000e+00> : vector<16x128xf32>
    %19 = tpu.matmul %16, %18, %cst_31 {dimension_numbers = #tpu.dot_dimension_numbers<[1], [0], [0], [1], [0, 0, 1, 1], [], []>} : vector<16x64xf32>, vector<64x128xf32>, vector<16x128xf32> -> vector<16x128xf32>
    %20 = arith.addf %14, %19 : vector<16x128xf32>
    %c0_32 = arith.constant 0 : index
    %c2 = arith.constant 2 : index
    %c0_33 = arith.constant 0 : index
    %21 = vector.load %arg7[%c0_32, %c2, %c0_33] : memref<2x18x64xf32, #tpu.memory_space<vmem>>, vector<1x16x64xf32>
    %22 = vector.shape_cast %21 : vector<1x16x64xf32> to vector<16x64xf32>
    %c2_34 = arith.constant 2 : index
    %c0_35 = arith.constant 0 : index
    %c0_36 = arith.constant 0 : index
    %23 = vector.load %arg2[%c2_34, %c0_35, %c0_36] : memref<3x64x128xf32, #tpu.memory_space<vmem>>, vector<1x64x128xf32>
    %24 = vector.shape_cast %23 : vector<1x64x128xf32> to vector<64x128xf32>
    %cst_37 = arith.constant dense<0.000000e+00> : vector<16x128xf32>
    %25 = tpu.matmul %22, %24, %cst_37 {dimension_numbers = #tpu.dot_dimension_numbers<[1], [0], [0], [1], [0, 0, 1, 1], [], []>} : vector<16x64xf32>, vector<64x128xf32>, vector<16x128xf32> -> vector<16x128xf32>
    %26 = arith.addf %20, %25 : vector<16x128xf32>
    %c0_38 = arith.constant 0 : index
    %c0_39 = arith.constant 0 : index
    %27 = vector.load %arg3[%c0_38, %c0_39] : memref<1x128xf32, #tpu.memory_space<vmem>>, vector<1x128xf32>
    %28 = vector.broadcast %27 : vector<1x128xf32> to vector<16x128xf32>
    %29 = arith.addf %26, %28 : vector<16x128xf32>
    %cst_40 = arith.constant 0.000000e+00 : f32
    %30 = vector.broadcast %cst_40 : f32 to vector<16x128xf32>
    %31 = arith.maximumf %29, %30 : vector<16x128xf32>
    %c0_41 = arith.constant 0 : index
    %c1_42 = arith.constant 1 : index
    %c0_43 = arith.constant 0 : index
    %32 = vector.load %arg8[%c0_41, %c1_42, %c0_43] : memref<2x18x128xf32, #tpu.memory_space<vmem>>, vector<1x16x128xf32>
    %33 = vector.shape_cast %32 : vector<1x16x128xf32> to vector<16x128xf32>
    %34 = vector.shape_cast %31 : vector<16x128xf32> to vector<1x16x128xf32>
    tpu.vector_store %arg8[%c0_41, %c1_42, %c0_43], %34 {strides = array<i32>} : memref<2x18x128xf32, #tpu.memory_space<vmem>>, vector<1x16x128xf32>,
    %c0_44 = arith.constant 0 : index
    %c0_45 = arith.constant 0 : index
    %c0_46 = arith.constant 0 : index
    %35 = vector.load %arg8[%c0_44, %c0_45, %c0_46] : memref<2x18x128xf32, #tpu.memory_space<vmem>>, vector<1x16x128xf32>
    %36 = vector.shape_cast %35 : vector<1x16x128xf32> to vector<16x128xf32>
    %c0_47 = arith.constant 0 : index
    %c0_48 = arith.constant 0 : index
    %c0_49 = arith.constant 0 : index
    %37 = vector.load %arg4[%c0_47, %c0_48, %c0_49] : memref<3x128x128xf32, #tpu.memory_space<vmem>>, vector<1x128x128xf32>
    %38 = vector.shape_cast %37 : vector<1x128x128xf32> to vector<128x128xf32>
    %cst_50 = arith.constant dense<0.000000e+00> : vector<16x128xf32>
    %39 = tpu.matmul %36, %38, %cst_50 {dimension_numbers = #tpu.dot_dimension_numbers<[1], [0], [0], [1], [0, 0, 1, 1], [], []>} : vector<16x128xf32>, vector<128x128xf32>, vector<16x128xf32> -> vector<16x128xf32>
    %c0_51 = arith.constant 0 : index
    %c1_52 = arith.constant 1 : index
    %c0_53 = arith.constant 0 : index
    %40 = vector.load %arg8[%c0_51, %c1_52, %c0_53] : memref<2x18x128xf32, #tpu.memory_space<vmem>>, vector<1x16x128xf32>
    %41 = vector.shape_cast %40 : vector<1x16x128xf32> to vector<16x128xf32>
    %c1_54 = arith.constant 1 : index
    %c0_55 = arith.constant 0 : index
    %c0_56 = arith.constant 0 : index
    %42 = vector.load %arg4[%c1_54, %c0_55, %c0_56] : memref<3x128x128xf32, #tpu.memory_space<vmem>>, vector<1x128x128xf32>
    %43 = vector.shape_cast %42 : vector<1x128x128xf32> to vector<128x128xf32>
    %cst_57 = arith.constant dense<0.000000e+00> : vector<16x128xf32>
    %44 = tpu.matmul %41, %43, %cst_57 {dimension_numbers = #tpu.dot_dimension_numbers<[1], [0], [0], [1], [0, 0, 1, 1], [], []>} : vector<16x128xf32>, vector<128x128xf32>, vector<16x128xf32> -> vector<16x128xf32>
    %45 = arith.addf %39, %44 : vector<16x128xf32>
    %c0_58 = arith.constant 0 : index
    %c2_59 = arith.constant 2 : index
    %c0_60 = arith.constant 0 : index
    %46 = vector.load %arg8[%c0_58, %c2_59, %c0_60] : memref<2x18x128xf32, #tpu.memory_space<vmem>>, vector<1x16x128xf32>
    %47 = vector.shape_cast %46 : vector<1x16x128xf32> to vector<16x128xf32>
    %c2_61 = arith.constant 2 : index
    %c0_62 = arith.constant 0 : index
    %c0_63 = arith.constant 0 : index
    %48 = vector.load %arg4[%c2_61, %c0_62, %c0_63] : memref<3x128x128xf32, #tpu.memory_space<vmem>>, vector<1x128x128xf32>
    %49 = vector.shape_cast %48 : vector<1x128x128xf32> to vector<128x128xf32>
    %cst_64 = arith.constant dense<0.000000e+00> : vector<16x128xf32>
    %50 = tpu.matmul %47, %49, %cst_64 {dimension_numbers = #tpu.dot_dimension_numbers<[1], [0], [0], [1], [0, 0, 1, 1], [], []>} : vector<16x128xf32>, vector<128x128xf32>, vector<16x128xf32> -> vector<16x128xf32>
    %51 = arith.addf %45, %50 : vector<16x128xf32>
    %c0_65 = arith.constant 0 : index
    %c0_66 = arith.constant 0 : index
    %52 = vector.load %arg5[%c0_65, %c0_66] : memref<1x128xf32, #tpu.memory_space<vmem>>, vector<1x128xf32>
    %53 = vector.broadcast %52 : vector<1x128xf32> to vector<16x128xf32>
    %54 = arith.addf %51, %53 : vector<16x128xf32>
    %cst_67 = arith.constant 0.000000e+00 : f32
    %55 = vector.broadcast %cst_67 : f32 to vector<16x128xf32>
    %56 = arith.maximumf %54, %55 : vector<16x128xf32>
    %c0_68 = arith.constant 0 : index
    %c0_69 = arith.constant 0 : index
    %c0_70 = arith.constant 0 : index
    %57 = vector.load %arg6[%c0_68, %c0_69, %c0_70] : memref<2x16x128xf32, #tpu.memory_space<vmem>>, vector<1x16x128xf32>
    %58 = vector.shape_cast %57 : vector<1x16x128xf32> to vector<16x128xf32>
    %59 = vector.shape_cast %56 : vector<16x128xf32> to vector<1x16x128xf32>
    tpu.vector_store %arg6[%c0_68, %c0_69, %c0_70], %59 {strides = array<i32>} : memref<2x16x128xf32, #tpu.memory_space<vmem>>, vector<1x16x128xf32>,
    %c1_71 = arith.constant 1 : index
    %c0_72 = arith.constant 0 : index
    %c0_73 = arith.constant 0 : index
    %60 = vector.load %arg7[%c1_71, %c0_72, %c0_73] : memref<2x18x64xf32, #tpu.memory_space<vmem>>, vector<1x16x64xf32>
    %61 = vector.shape_cast %60 : vector<1x16x64xf32> to vector<16x64xf32>
    %c0_74 = arith.constant 0 : index
    %c0_75 = arith.constant 0 : index
    %c0_76 = arith.constant 0 : index
    %62 = vector.load %arg2[%c0_74, %c0_75, %c0_76] : memref<3x64x128xf32, #tpu.memory_space<vmem>>, vector<1x64x128xf32>
    %63 = vector.shape_cast %62 : vector<1x64x128xf32> to vector<64x128xf32>
    %cst_77 = arith.constant dense<0.000000e+00> : vector<16x128xf32>
    %64 = tpu.matmul %61, %63, %cst_77 {dimension_numbers = #tpu.dot_dimension_numbers<[1], [0], [0], [1], [0, 0, 1, 1], [], []>} : vector<16x64xf32>, vector<64x128xf32>, vector<16x128xf32> -> vector<16x128xf32>
    %c1_78 = arith.constant 1 : index
    %c1_79 = arith.constant 1 : index
    %c0_80 = arith.constant 0 : index
    %65 = vector.load %arg7[%c1_78, %c1_79, %c0_80] : memref<2x18x64xf32, #tpu.memory_space<vmem>>, vector<1x16x64xf32>
    %66 = vector.shape_cast %65 : vector<1x16x64xf32> to vector<16x64xf32>
    %c1_81 = arith.constant 1 : index
    %c0_82 = arith.constant 0 : index
    %c0_83 = arith.constant 0 : index
    %67 = vector.load %arg2[%c1_81, %c0_82, %c0_83] : memref<3x64x128xf32, #tpu.memory_space<vmem>>, vector<1x64x128xf32>
    %68 = vector.shape_cast %67 : vector<1x64x128xf32> to vector<64x128xf32>
    %cst_84 = arith.constant dense<0.000000e+00> : vector<16x128xf32>
    %69 = tpu.matmul %66, %68, %cst_84 {dimension_numbers = #tpu.dot_dimension_numbers<[1], [0], [0], [1], [0, 0, 1, 1], [], []>} : vector<16x64xf32>, vector<64x128xf32>, vector<16x128xf32> -> vector<16x128xf32>
    %70 = arith.addf %64, %69 : vector<16x128xf32>
    %c1_85 = arith.constant 1 : index
    %c2_86 = arith.constant 2 : index
    %c0_87 = arith.constant 0 : index
    %71 = vector.load %arg7[%c1_85, %c2_86, %c0_87] : memref<2x18x64xf32, #tpu.memory_space<vmem>>, vector<1x16x64xf32>
    %72 = vector.shape_cast %71 : vector<1x16x64xf32> to vector<16x64xf32>
    %c2_88 = arith.constant 2 : index
    %c0_89 = arith.constant 0 : index
    %c0_90 = arith.constant 0 : index
    %73 = vector.load %arg2[%c2_88, %c0_89, %c0_90] : memref<3x64x128xf32, #tpu.memory_space<vmem>>, vector<1x64x128xf32>
    %74 = vector.shape_cast %73 : vector<1x64x128xf32> to vector<64x128xf32>
    %cst_91 = arith.constant dense<0.000000e+00> : vector<16x128xf32>
    %75 = tpu.matmul %72, %74, %cst_91 {dimension_numbers = #tpu.dot_dimension_numbers<[1], [0], [0], [1], [0, 0, 1, 1], [], []>} : vector<16x64xf32>, vector<64x128xf32>, vector<16x128xf32> -> vector<16x128xf32>
    %76 = arith.addf %70, %75 : vector<16x128xf32>
    %c0_92 = arith.constant 0 : index
    %c0_93 = arith.constant 0 : index
    %77 = vector.load %arg3[%c0_92, %c0_93] : memref<1x128xf32, #tpu.memory_space<vmem>>, vector<1x128xf32>
    %78 = vector.broadcast %77 : vector<1x128xf32> to vector<16x128xf32>
    %79 = arith.addf %76, %78 : vector<16x128xf32>
    %cst_94 = arith.constant 0.000000e+00 : f32
    %80 = vector.broadcast %cst_94 : f32 to vector<16x128xf32>
    %81 = arith.maximumf %79, %80 : vector<16x128xf32>
    %c1_95 = arith.constant 1 : index
    %c1_96 = arith.constant 1 : index
    %c0_97 = arith.constant 0 : index
    %82 = vector.load %arg8[%c1_95, %c1_96, %c0_97] : memref<2x18x128xf32, #tpu.memory_space<vmem>>, vector<1x16x128xf32>
    %83 = vector.shape_cast %82 : vector<1x16x128xf32> to vector<16x128xf32>
    %84 = vector.shape_cast %81 : vector<16x128xf32> to vector<1x16x128xf32>
    tpu.vector_store %arg8[%c1_95, %c1_96, %c0_97], %84 {strides = array<i32>} : memref<2x18x128xf32, #tpu.memory_space<vmem>>, vector<1x16x128xf32>,
    %c1_98 = arith.constant 1 : index
    %c0_99 = arith.constant 0 : index
    %c0_100 = arith.constant 0 : index
    %85 = vector.load %arg8[%c1_98, %c0_99, %c0_100] : memref<2x18x128xf32, #tpu.memory_space<vmem>>, vector<1x16x128xf32>
    %86 = vector.shape_cast %85 : vector<1x16x128xf32> to vector<16x128xf32>
    %c0_101 = arith.constant 0 : index
    %c0_102 = arith.constant 0 : index
    %c0_103 = arith.constant 0 : index
    %87 = vector.load %arg4[%c0_101, %c0_102, %c0_103] : memref<3x128x128xf32, #tpu.memory_space<vmem>>, vector<1x128x128xf32>
    %88 = vector.shape_cast %87 : vector<1x128x128xf32> to vector<128x128xf32>
    %cst_104 = arith.constant dense<0.000000e+00> : vector<16x128xf32>
    %89 = tpu.matmul %86, %88, %cst_104 {dimension_numbers = #tpu.dot_dimension_numbers<[1], [0], [0], [1], [0, 0, 1, 1], [], []>} : vector<16x128xf32>, vector<128x128xf32>, vector<16x128xf32> -> vector<16x128xf32>
    %c1_105 = arith.constant 1 : index
    %c1_106 = arith.constant 1 : index
    %c0_107 = arith.constant 0 : index
    %90 = vector.load %arg8[%c1_105, %c1_106, %c0_107] : memref<2x18x128xf32, #tpu.memory_space<vmem>>, vector<1x16x128xf32>
    %91 = vector.shape_cast %90 : vector<1x16x128xf32> to vector<16x128xf32>
    %c1_108 = arith.constant 1 : index
    %c0_109 = arith.constant 0 : index
    %c0_110 = arith.constant 0 : index
    %92 = vector.load %arg4[%c1_108, %c0_109, %c0_110] : memref<3x128x128xf32, #tpu.memory_space<vmem>>, vector<1x128x128xf32>
    %93 = vector.shape_cast %92 : vector<1x128x128xf32> to vector<128x128xf32>
    %cst_111 = arith.constant dense<0.000000e+00> : vector<16x128xf32>
    %94 = tpu.matmul %91, %93, %cst_111 {dimension_numbers = #tpu.dot_dimension_numbers<[1], [0], [0], [1], [0, 0, 1, 1], [], []>} : vector<16x128xf32>, vector<128x128xf32>, vector<16x128xf32> -> vector<16x128xf32>
    %95 = arith.addf %89, %94 : vector<16x128xf32>
    %c1_112 = arith.constant 1 : index
    %c2_113 = arith.constant 2 : index
    %c0_114 = arith.constant 0 : index
    %96 = vector.load %arg8[%c1_112, %c2_113, %c0_114] : memref<2x18x128xf32, #tpu.memory_space<vmem>>, vector<1x16x128xf32>
    %97 = vector.shape_cast %96 : vector<1x16x128xf32> to vector<16x128xf32>
    %c2_115 = arith.constant 2 : index
    %c0_116 = arith.constant 0 : index
    %c0_117 = arith.constant 0 : index
    %98 = vector.load %arg4[%c2_115, %c0_116, %c0_117] : memref<3x128x128xf32, #tpu.memory_space<vmem>>, vector<1x128x128xf32>
    %99 = vector.shape_cast %98 : vector<1x128x128xf32> to vector<128x128xf32>
    %cst_118 = arith.constant dense<0.000000e+00> : vector<16x128xf32>
    %100 = tpu.matmul %97, %99, %cst_118 {dimension_numbers = #tpu.dot_dimension_numbers<[1], [0], [0], [1], [0, 0, 1, 1], [], []>} : vector<16x128xf32>, vector<128x128xf32>, vector<16x128xf32> -> vector<16x128xf32>
    %101 = arith.addf %95, %100 : vector<16x128xf32>
    %c0_119 = arith.constant 0 : index
    %c0_120 = arith.constant 0 : index
    %102 = vector.load %arg5[%c0_119, %c0_120] : memref<1x128xf32, #tpu.memory_space<vmem>>, vector<1x128xf32>
    %103 = vector.broadcast %102 : vector<1x128xf32> to vector<16x128xf32>
    %104 = arith.addf %101, %103 : vector<16x128xf32>
    %cst_121 = arith.constant 0.000000e+00 : f32
    %105 = vector.broadcast %cst_121 : f32 to vector<16x128xf32>
    %106 = arith.maximumf %104, %105 : vector<16x128xf32>
    %c1_122 = arith.constant 1 : index
    %c0_123 = arith.constant 0 : index
    %c0_124 = arith.constant 0 : index
    %107 = vector.load %arg6[%c1_122, %c0_123, %c0_124] : memref<2x16x128xf32, #tpu.memory_space<vmem>>, vector<1x16x128xf32>
    %108 = vector.shape_cast %107 : vector<1x16x128xf32> to vector<16x128xf32>
    %109 = vector.shape_cast %106 : vector<16x128xf32> to vector<1x16x128xf32>
    tpu.vector_store %arg6[%c1_122, %c0_123, %c0_124], %109 {strides = array<i32>} : memref<2x16x128xf32, #tpu.memory_space<vmem>>, vector<1x16x128xf32>,
    return
  }
  func.func @transform_0(%arg0: i32) -> (i32, i32, i32) {
    %c0_i32 = arith.constant 0 : i32
    %c0_i32_0 = arith.constant 0 : i32
    %c0_i32_1 = arith.constant 0 : i32
    return %arg0, %c0_i32, %c0_i32_0 : i32, i32, i32
  }
  func.func @transform_1(%arg0: i32) -> (i32, i32, i32) {
    %c0_i32 = arith.constant 0 : i32
    %c0_i32_0 = arith.constant 0 : i32
    %c0_i32_1 = arith.constant 0 : i32
    %c0_i32_2 = arith.constant 0 : i32
    return %c0_i32, %c0_i32_0, %c0_i32_1 : i32, i32, i32
  }
  func.func @transform_2(%arg0: i32) -> (i32, i32) {
    %c0_i32 = arith.constant 0 : i32
    %c0_i32_0 = arith.constant 0 : i32
    %c0_i32_1 = arith.constant 0 : i32
    return %c0_i32, %c0_i32_0 : i32, i32
  }
  func.func @transform_3(%arg0: i32) -> (i32, i32, i32) {
    %c0_i32 = arith.constant 0 : i32
    %c0_i32_0 = arith.constant 0 : i32
    %c0_i32_1 = arith.constant 0 : i32
    %c0_i32_2 = arith.constant 0 : i32
    return %c0_i32, %c0_i32_0, %c0_i32_1 : i32, i32, i32
  }
  func.func @transform_4(%arg0: i32) -> (i32, i32) {
    %c0_i32 = arith.constant 0 : i32
    %c0_i32_0 = arith.constant 0 : i32
    %c0_i32_1 = arith.constant 0 : i32
    return %c0_i32, %c0_i32_0 : i32, i32
  }
  func.func @transform_5(%arg0: i32) -> (i32, i32, i32) {
    %c0_i32 = arith.constant 0 : i32
    %c0_i32_0 = arith.constant 0 : i32
    %c0_i32_1 = arith.constant 0 : i32
    return %arg0, %c0_i32, %c0_i32_0 : i32, i32, i32
  }
}

</mosaic_0001>

<llo_original>
// kernel: double_convolution_block.1
$region0: #{double_convolution_block.1}
  #allocation0 [shape = 'u32[]', space=smem, size = 0x4, offset = 0x4, fixed_abs, tag = 'smem constant byte address 0x4 - core index']
  #allocation1 [shape = 'u32[144,128]{1,0:T(1,128)}', space=vmem, size = 0x12000, scoped, tag = 'internal scratch']
  #allocation2 [shape = 'f32[2,18,64]{2,1,0:T(8,128)}', space=vmem, size = 0x6000, scoped, tag = 'scratch operand']
  #allocation3 [shape = 'f32[2,18,128]{2,1,0:T(8,128)}', space=vmem, size = 0x6000, scoped, tag = 'scratch operand']
  %s0 = inlined_call_operand.vmem [shape: f32[2,16,64], index: 0, kind: input, shape index: {}]
  %s1 = inlined_call_operand.hbm [shape: f32[3,64,128], index: 1, kind: input, shape index: {}]
  %s2 = inlined_call_operand.vmem [shape: f32[1,128], index: 2, kind: input, shape index: {}]
  %s3 = inlined_call_operand.vmem [shape: f32[3,128,128], index: 3, kind: input, shape index: {}]
  %s4 = inlined_call_operand.vmem [shape: f32[1,128], index: 4, kind: input, shape index: {}]
  %s5 = inlined_call_operand.vmem [shape: f32[2,16,128], index: 5, kind: output, shape index: {}]
  %s6 = sld [smem:[#allocation0]]
  $region34: #{double_convolution_block.1} parent=0
    _
  %s8 = ssub.s32 1, %s6
  %s9 = scalar_select 0, %s8, %s6
  $region1: #{double_convolution_block.1} parent=0
    #allocation4 [shape = 'u8[98304]{0}', space=vmem, size = 0x18000, scoped, tag = 'input window, operand 1, single buffered']
    #allocation5 [shape = 's32[1]{0}', space=sflag, size = 0x4, scoped, tag = 'scoped memory for double_convolution_block.1']
    %10 = vsyncpa [#allocation5], 0
    // Predicated region
    $region2: #{double_convolution_block.1} parent=1 // pred_check
      _
    $region3: #{double_convolution_block.1} parent=1 // pred_check_branch
      %12 = sbr.rel (0) target = $region5
    $region4: #{double_convolution_block.1} parent=1 // pred_region
      _
    $region5: #{double_convolution_block.1} parent=1 // pred_fallthru
      _
    // Predicated region
    $region6: #{double_convolution_block.1} parent=1 // pred_check
      _
    $region7: #{double_convolution_block.1} parent=1 // pred_check_branch
      %14 = sbr.rel (0) target = $region9
    $region8: #{double_convolution_block.1} parent=1 // pred_region
      %s16 = ssub.s32 3072, 3072
      %17 = vsyncadd [#allocation5], %s16
      %s18 = sshll.u32 [#allocation4], 4
      %s19 = int_to_ptr.vmem [resolvable:$true] %s18
      %24 = dma.hbm_to_vmem [thread:$0]  %s1, 3072, %s19, [#allocation5], 128, 128, 8
    $region9: #{double_convolution_block.1} parent=1 // pred_fallthru
      _
    // Predicated region
    $region10: #{double_convolution_block.1} parent=1 // pred_check
      _
    $region11: #{double_convolution_block.1} parent=1 // pred_check_branch
      %26 = sbr.rel (0) target = $region13
    $region12: #{double_convolution_block.1} parent=1 // pred_region
      _
    $region13: #{double_convolution_block.1} parent=1 // pred_fallthru
      _
    // Predicated region
    $region14: #{double_convolution_block.1} parent=1 // pred_check
      _
    $region15: #{double_convolution_block.1} parent=1 // pred_check_branch
      %28 = sbr.rel (0) target = $region17
    $region16: #{double_convolution_block.1} parent=1 // pred_region
      _
    $region17: #{double_convolution_block.1} parent=1 // pred_fallthru
      _
    // Predicated region
    $region18: #{double_convolution_block.1} parent=1 // pred_check
      _
    $region19: #{double_convolution_block.1} parent=1 // pred_check_branch
      %30 = sbr.rel (0) target = $region21
    $region20: #{double_convolution_block.1} parent=1 // pred_region
      _
    $region21: #{double_convolution_block.1} parent=1 // pred_fallthru
      _
    // Predicated region
    $region22: #{double_convolution_block.1} parent=1 // pred_check
      _
    $region23: #{double_convolution_block.1} parent=1 // pred_check_branch
      %32 = sbr.rel (0) target = $region25
    $region24: #{double_convolution_block.1} parent=1 // pred_region
      %33 = dma.done [#allocation5], 3072
    $region25: #{double_convolution_block.1} parent=1 // pred_fallthru
      _
    %vm34 = vcmask 516096
    %35 = vst.msk [vmem:[#allocation2] sm:$0x1] %vm34, 0.0
    %36 = vst.msk [vmem:[#allocation2 + $0x18] sm:$0x1] %vm34, 0.0
    %37 = vst.msk [vmem:[#allocation2 + $0x11] sm:$0x1] %vm34, 0.0
    %38 = vst.msk [vmem:[#allocation2 + $0x29] sm:$0x1] %vm34, 0.0
    %39 = vst [vmem:[#allocation3] sm:$0x1] 0.0
    %40 = vst [vmem:[#allocation3 + $0x18] sm:$0x1] 0.0
    %41 = vst [vmem:[#allocation3 + $0x11] sm:$0x1] 0.0
    %42 = vst [vmem:[#allocation3 + $0x29] sm:$0x1] 0.0
    %v43 = vld [vmem:[%s0] sm:$0xff]
    %v44 = vld [vmem:[%s0 + $0x8] sm:$0xff]
    %v45 = vld [vmem:[%s0 + $0x10] sm:$0xff]
    %v46 = vld [vmem:[%s0 + $0x18] sm:$0xff]
    %vm47 = vcmask 523264
    %48 = vst.msk [vmem:[#allocation2 + $0x1] sm:$0xff] %vm47, %v43
    %49 = vst.msk [vmem:[#allocation2 + $0x9] sm:$0xff] %vm47, %v44
    %50 = vst.msk [vmem:[#allocation2 + $0x19] sm:$0xff] %vm47, %v45
    %51 = vst.msk [vmem:[#allocation2 + $0x21] sm:$0xff] %vm47, %v46
    %v52 = vld [vmem:[#allocation2] sm:$0xff]
    %v53 = vld [vmem:[#allocation2 + $0x8] sm:$0xff]
    %v54 = vld [vmem:[#allocation4] sm:$0xff]
    %v55 = vld [vmem:[#allocation4 + $0x8] sm:$0xff]
    %v56 = vld [vmem:[#allocation4 + $0x10] sm:$0xff]
    %v57 = vld [vmem:[#allocation4 + $0x18] sm:$0xff]
    %v58 = vld [vmem:[#allocation4 + $0x20] sm:$0xff]
    %v59 = vld [vmem:[#allocation4 + $0x28] sm:$0xff]
    %v60 = vld [vmem:[#allocation4 + $0x30] sm:$0xff]
    %v61 = vld [vmem:[#allocation4 + $0x38] sm:$0xff]
    %v62 = vld [vmem:[#allocation2 + $0x1] sm:$0xff]
    %v63 = vld [vmem:[#allocation2 + $0x9] sm:$0xff]
    %s64 = scalar_lea.vmem [#allocation4], 64
    %v65 = vld [vmem:[%s64] sm:$0xff]
    %v66 = vld [vmem:[%s64 + $0x8] sm:$0xff]
    %v67 = vld [vmem:[%s64 + $0x10] sm:$0xff]
    %v68 = vld [vmem:[%s64 + $0x18] sm:$0xff]
    %v69 = vld [vmem:[%s64 + $0x20] sm:$0xff]
    %v70 = vld [vmem:[%s64 + $0x28] sm:$0xff]
    %v71 = vld [vmem:[%s64 + $0x30] sm:$0xff]
    %v72 = vld [vmem:[%s64 + $0x38] sm:$0xff]
    %v74 = vsel %vm47, %v62, 0
    %v77 = vsel %vm47, %v63, 0
    %79 = vmatprep.subr.mxu0 0.0
    %80 = vmatpush1.msra.mxu0 0.0
    %81 = vmatprep.subr.mxu0 0.0
    %82 = vmatpush1.msra.mxu0 0.0
    %83 = vmatprep.subr.mxu0 0.0
    %84 = vmatpush1.msra.mxu0 0.0
    %85 = vmatprep.subr.mxu0 0.0
    %86 = vmatpush1.msra.mxu0 0.0
    %87 = vmatprep.subr.mxu0 0.0
    %88 = vmatpush1.msra.mxu0 0.0
    %89 = vmatprep.subr.mxu0 0.0
    %90 = vmatpush1.msra.mxu0 0.0
    %91 = vmatprep.subr.mxu0 0.0
    %92 = vmatpush1.msra.mxu0 0.0
    %93 = vmatprep.subr.mxu0 0.0
    %94 = vmatpush1.msra.mxu0 0.0
    %95 = vmatprep.subr.mxu0 0.0
    %96 = vmatpush1.msra.mxu0 %v72
    %97 = vmatprep.subr.mxu0 0.0
    %98 = vmatpush1.msra.mxu0 %v71
    %99 = vmatprep.subr.mxu0 0.0
    %100 = vmatpush1.msra.mxu0 %v70
    %101 = vmatprep.subr.mxu0 0.0
    %102 = vmatpush1.msra.mxu0 %v69
    %103 = vmatprep.subr.mxu0 0.0
    %104 = vmatpush1.msra.mxu0 %v68
    %105 = vmatprep.subr.mxu0 0.0
    %106 = vmatpush1.msra.mxu0 %v67
    %107 = vmatprep.subr.mxu0 0.0
    %108 = vmatpush1.msra.mxu0 %v66
    %109 = vmatprep.subr.mxu0 0.0
    %110 = vmatpush1.msra.mxu0 %v65
    %111 = vmatprep.subr.mxu0 0.0
    %112 = vmatpush2.msra.mxu0 0.0
    %113 = vmatprep.subr.mxu0 0.0
    %114 = vmatpush2.msra.mxu0 0.0
    %115 = vmatprep.subr.mxu0 0.0
    %116 = vmatpush2.msra.mxu0 0.0
    %117 = vmatprep.subr.mxu0 0.0
    %118 = vmatpush2.msra.mxu0 0.0
    %119 = vmatprep.subr.mxu0 0.0
    %120 = vmatpush2.msra.mxu0 0.0
    %121 = vmatprep.subr.mxu0 0.0
    %122 = vmatpush2.msra.mxu0 0.0
    %123 = vmatprep.subr.mxu0 0.0
    %124 = vmatpush2.msra.mxu0 0.0
    %125 = vmatprep.subr.mxu0 0.0
    %126 = vmatpush2.msra.mxu0 0.0
    %127 = vmatprep.subr.mxu0 0.0
    %128 = vmatpush2.msra.mxu0 0.0
    %129 = vmatprep.subr.mxu0 0.0
    %130 = vmatpush2.msra.mxu0 0.0
    %131 = vmatprep.subr.mxu0 0.0
    %132 = vmatpush2.msra.mxu0 0.0
    %133 = vmatprep.subr.mxu0 0.0
    %134 = vmatpush2.msra.mxu0 0.0
    %135 = vmatprep.subr.mxu0 0.0
    %136 = vmatpush2.msra.mxu0 0.0
    %137 = vmatprep.subr.mxu0 0.0
    %138 = vmatpush2.msra.mxu0 0.0
    %139 = vmatprep.subr.mxu0 0.0
    %140 = vmatpush2.msra.mxu0 0.0
    %141 = vmatprep.subr.mxu0 0.0
    %142 = vmatpush2.msra.mxu0 0.0
    %143 = vmatprep.mubr.f32.mxu0 0.0
    %144 = vmatmul.mubr.f32.gmra.mxu0 %v74
    %v145 = vpop.f32.mrf.mxu0
    %v146 = vadd.f32 0.0, %v145
    %v147 = vpop.f32.mrf.mxu0
    %148 = vmatprep.mubr.f32.mxu0 0.0
    %149 = vmatmul.mubr.f32.gmra.mxu0 %v77
    %v150 = vpop.f32.mrf.mxu0
    %v151 = vadd.f32 0.0, %v150
    %v152 = vpop.f32.mrf.mxu0
    %153 = vdwg.mxu0
    %v155 = vsel %vm47, %v52, 0
    %v158 = vsel %vm47, %v53, 0
    %160 = vmatprep.subr.mxu0 0.0
    %161 = vmatpush1.msra.mxu0 0.0
    %162 = vmatprep.subr.mxu0 0.0
    %163 = vmatpush1.msra.mxu0 0.0
    %164 = vmatprep.subr.mxu0 0.0
    %165 = vmatpush1.msra.mxu0 0.0
    %166 = vmatprep.subr.mxu0 0.0
    %167 = vmatpush1.msra.mxu0 0.0
    %168 = vmatprep.subr.mxu0 0.0
    %169 = vmatpush1.msra.mxu0 0.0
    %170 = vmatprep.subr.mxu0 0.0
    %171 = vmatpush1.msra.mxu0 0.0
    %172 = vmatprep.subr.mxu0 0.0
    %173 = vmatpush1.msra.mxu0 0.0
    %174 = vmatprep.subr.mxu0 0.0
    %175 = vmatpush1.msra.mxu0 0.0
    %176 = vmatprep.subr.mxu0 0.0
    %177 = vmatpush1.msra.mxu0 %v61
    %178 = vmatprep.subr.mxu0 0.0
    %179 = vmatpush1.msra.mxu0 %v60
    %180 = vmatprep.subr.mxu0 0.0
    %181 = vmatpush1.msra.mxu0 %v59
    %182 = vmatprep.subr.mxu0 0.0
    %183 = vmatpush1.msra.mxu0 %v58
    %184 = vmatprep.subr.mxu0 0.0
    %185 = vmatpush1.msra.mxu0 %v57
    %186 = vmatprep.subr.mxu0 0.0
    %187 = vmatpush1.msra.mxu0 %v56
    %188 = vmatprep.subr.mxu0 0.0
    %189 = vmatpush1.msra.mxu0 %v55
    %190 = vmatprep.subr.mxu0 0.0
    %191 = vmatpush1.msra.mxu0 %v54
    %192 = vmatprep.subr.mxu0 0.0
    %193 = vmatpush2.msra.mxu0 0.0
    %194 = vmatprep.subr.mxu0 0.0
    %195 = vmatpush2.msra.mxu0 0.0
    %196 = vmatprep.subr.mxu0 0.0
    %197 = vmatpush2.msra.mxu0 0.0
    %198 = vmatprep.subr.mxu0 0.0
    %199 = vmatpush2.msra.mxu0 0.0
    %200 = vmatprep.subr.mxu0 0.0
    %201 = vmatpush2.msra.mxu0 0.0
    %202 = vmatprep.subr.mxu0 0.0
    %203 = vmatpush2.msra.mxu0 0.0
    %204 = vmatprep.subr.mxu0 0.0
    %205 = vmatpush2.msra.mxu0 0.0
    %206 = vmatprep.subr.mxu0 0.0
    %207 = vmatpush2.msra.mxu0 0.0
    %208 = vmatprep.subr.mxu0 0.0
    %209 = vmatpush2.msra.mxu0 0.0
    %210 = vmatprep.subr.mxu0 0.0
    %211 = vmatpush2.msra.mxu0 0.0
    %212 = vmatprep.subr.mxu0 0.0
    %213 = vmatpush2.msra.mxu0 0.0
    %214 = vmatprep.subr.mxu0 0.0
    %215 = vmatpush2.msra.mxu0 0.0
    %216 = vmatprep.subr.mxu0 0.0
    %217 = vmatpush2.msra.mxu0 0.0
    %218 = vmatprep.subr.mxu0 0.0
    %219 = vmatpush2.msra.mxu0 0.0
    %220 = vmatprep.subr.mxu0 0.0
    %221 = vmatpush2.msra.mxu0 0.0
    %222 = vmatprep.subr.mxu0 0.0
    %223 = vmatpush2.msra.mxu0 0.0
    %224 = vmatprep.mubr.f32.mxu0 0.0
    %225 = vmatmul.mubr.f32.gmra.mxu0 %v155
    %v226 = vpop.f32.mrf.mxu0
    %v227 = vadd.f32 %v146, %v226
    %v228 = vpop.f32.mrf.mxu0
    %229 = vmatprep.mubr.f32.mxu0 0.0
    %230 = vmatmul.mubr.f32.gmra.mxu0 %v158
    %v231 = vpop.f32.mrf.mxu0
    %v232 = vadd.f32 %v151, %v231
    %v233 = vpop.f32.mrf.mxu0
    %234 = vdwg.mxu0
    %v235 = vld [vmem:[#allocation2 + $0x2] sm:$0xff]
    %v236 = vld [vmem:[#allocation2 + $0xa] sm:$0xff]
    %s237 = scalar_lea.vmem [#allocation4], 128
    %v238 = vld [vmem:[%s237] sm:$0xff]
    %v239 = vld [vmem:[%s237 + $0x8] sm:$0xff]
    %v240 = vld [vmem:[%s237 + $0x10] sm:$0xff]
    %v241 = vld [vmem:[%s237 + $0x18] sm:$0xff]
    %v242 = vld [vmem:[%s237 + $0x20] sm:$0xff]
    %v243 = vld [vmem:[%s237 + $0x28] sm:$0xff]
    %v244 = vld [vmem:[%s237 + $0x30] sm:$0xff]
    %v245 = vld [vmem:[%s237 + $0x38] sm:$0xff]
    %v247 = vsel %vm47, %v235, 0
    %v250 = vsel %vm47, %v236, 0
    %252 = vmatprep.subr.mxu0 0.0
    %253 = vmatpush1.msra.mxu0 0.0
    %254 = vmatprep.subr.mxu0 0.0
    %255 = vmatpush1.msra.mxu0 0.0
    %256 = vmatprep.subr.mxu0 0.0
    %257 = vmatpush1.msra.mxu0 0.0
    %258 = vmatprep.subr.mxu0 0.0
    %259 = vmatpush1.msra.mxu0 0.0
    %260 = vmatprep.subr.mxu0 0.0
    %261 = vmatpush1.msra.mxu0 0.0
    %262 = vmatprep.subr.mxu0 0.0
    %263 = vmatpush1.msra.mxu0 0.0
    %264 = vmatprep.subr.mxu0 0.0
    %265 = vmatpush1.msra.mxu0 0.0
    %266 = vmatprep.subr.mxu0 0.0
    %267 = vmatpush1.msra.mxu0 0.0
    %268 = vmatprep.subr.mxu0 0.0
    %269 = vmatpush1.msra.mxu0 %v245
    %270 = vmatprep.subr.mxu0 0.0
    %271 = vmatpush1.msra.mxu0 %v244
    %272 = vmatprep.subr.mxu0 0.0
    %273 = vmatpush1.msra.mxu0 %v243
    %274 = vmatprep.subr.mxu0 0.0
    %275 = vmatpush1.msra.mxu0 %v242
    %276 = vmatprep.subr.mxu0 0.0
    %277 = vmatpush1.msra.mxu0 %v241
    %278 = vmatprep.subr.mxu0 0.0
    %279 = vmatpush1.msra.mxu0 %v240
    %280 = vmatprep.subr.mxu0 0.0
    %281 = vmatpush1.msra.mxu0 %v239
    %282 = vmatprep.subr.mxu0 0.0
    %283 = vmatpush1.msra.mxu0 %v238
    %284 = vmatprep.subr.mxu0 0.0
    %285 = vmatpush2.msra.mxu0 0.0
    %286 = vmatprep.subr.mxu0 0.0
    %287 = vmatpush2.msra.mxu0 0.0
    %288 = vmatprep.subr.mxu0 0.0
    %289 = vmatpush2.msra.mxu0 0.0
    %290 = vmatprep.subr.mxu0 0.0
    %291 = vmatpush2.msra.mxu0 0.0
    %292 = vmatprep.subr.mxu0 0.0
    %293 = vmatpush2.msra.mxu0 0.0
    %294 = vmatprep.subr.mxu0 0.0
    %295 = vmatpush2.msra.mxu0 0.0
    %296 = vmatprep.subr.mxu0 0.0
    %297 = vmatpush2.msra.mxu0 0.0
    %298 = vmatprep.subr.mxu0 0.0
    %299 = vmatpush2.msra.mxu0 0.0
    %300 = vmatprep.subr.mxu0 0.0
    %301 = vmatpush2.msra.mxu0 0.0
    %302 = vmatprep.subr.mxu0 0.0
    %303 = vmatpush2.msra.mxu0 0.0
    %304 = vmatprep.subr.mxu0 0.0
    %305 = vmatpush2.msra.mxu0 0.0
    %306 = vmatprep.subr.mxu0 0.0
    %307 = vmatpush2.msra.mxu0 0.0
    %308 = vmatprep.subr.mxu0 0.0
    %309 = vmatpush2.msra.mxu0 0.0
    %310 = vmatprep.subr.mxu0 0.0
    %311 = vmatpush2.msra.mxu0 0.0
    %312 = vmatprep.subr.mxu0 0.0
    %313 = vmatpush2.msra.mxu0 0.0
    %314 = vmatprep.subr.mxu0 0.0
    %315 = vmatpush2.msra.mxu0 0.0
    %316 = vmatprep.mubr.f32.mxu0 0.0
    %317 = vmatmul.mubr.f32.gmra.mxu0 %v247
    %v318 = vpop.f32.mrf.mxu0
    %v319 = vadd.f32 0.0, %v318
    %v320 = vpop.f32.mrf.mxu0
    %321 = vmatprep.mubr.f32.mxu0 0.0
    %322 = vmatmul.mubr.f32.gmra.mxu0 %v250
    %v323 = vpop.f32.mrf.mxu0
    %v324 = vadd.f32 0.0, %v323
    %v325 = vpop.f32.mrf.mxu0
    %326 = vdwg.mxu0
    %v327 = vadd.f32 %v227, %v319
    %v328 = vadd.f32 %v232, %v324
    %v329 = vld [vmem:[%s2] sm:$0x1]
    %v331 = vlaneseq
    %v332 = vshrl.u32 %v331, 7
    %v333 = vsub.s32 0, %v332
    %v334 = vrot.slane %v329, %v333
    %v336 = vadd.f32 %v327, %v334
    %v337 = vadd.f32 %v328, %v334
    %v338 = vmax.f32 %v336, 0.0
    %v339 = vmax.f32 %v337, 0.0
    %340 = vst [vmem:[#allocation3 + $0x1] sm:$0xff] %v338
    %341 = vst [vmem:[#allocation3 + $0x9] sm:$0xff] %v339
    %v342 = vld [vmem:[#allocation3] sm:$0xff]
    %v343 = vld [vmem:[#allocation3 + $0x8] sm:$0xff]
    %v344 = vld [vmem:[%s3] sm:$0xff]
    %v345 = vld [vmem:[%s3 + $0x8] sm:$0xff]
    %v346 = vld [vmem:[%s3 + $0x10] sm:$0xff]
    %v347 = vld [vmem:[%s3 + $0x18] sm:$0xff]
    %v348 = vld [vmem:[%s3 + $0x20] sm:$0xff]
    %v349 = vld [vmem:[%s3 + $0x28] sm:$0xff]
    %v350 = vld [vmem:[%s3 + $0x30] sm:$0xff]
    %v351 = vld [vmem:[%s3 + $0x38] sm:$0xff]
    %v352 = vld [vmem:[%s3 + $0x40] sm:$0xff]
    %v353 = vld [vmem:[%s3 + $0x48] sm:$0xff]
    %v354 = vld [vmem:[%s3 + $0x50] sm:$0xff]
    %v355 = vld [vmem:[%s3 + $0x58] sm:$0xff]
    %v356 = vld [vmem:[%s3 + $0x60] sm:$0xff]
    %v357 = vld [vmem:[%s3 + $0x68] sm:$0xff]
    %v358 = vld [vmem:[%s3 + $0x70] sm:$0xff]
    %v359 = vld [vmem:[%s3 + $0x78] sm:$0xff]
    %v360 = vld [vmem:[#allocation3 + $0x1] sm:$0xff]
    %v361 = vld [vmem:[#allocation3 + $0x9] sm:$0xff]
    %s362 = scalar_lea.vmem %s3, 128
    %v363 = vld [vmem:[%s362] sm:$0xff]
    %v364 = vld [vmem:[%s362 + $0x8] sm:$0xff]
    %v365 = vld [vmem:[%s362 + $0x10] sm:$0xff]
    %v366 = vld [vmem:[%s362 + $0x18] sm:$0xff]
    %v367 = vld [vmem:[%s362 + $0x20] sm:$0xff]
    %v368 = vld [vmem:[%s362 + $0x28] sm:$0xff]
    %v369 = vld [vmem:[%s362 + $0x30] sm:$0xff]
    %v370 = vld [vmem:[%s362 + $0x38] sm:$0xff]
    %v371 = vld [vmem:[%s362 + $0x40] sm:$0xff]
    %v372 = vld [vmem:[%s362 + $0x48] sm:$0xff]
    %v373 = vld [vmem:[%s362 + $0x50] sm:$0xff]
    %v374 = vld [vmem:[%s362 + $0x58] sm:$0xff]
    %v375 = vld [vmem:[%s362 + $0x60] sm:$0xff]
    %v376 = vld [vmem:[%s362 + $0x68] sm:$0xff]
    %v377 = vld [vmem:[%s362 + $0x70] sm:$0xff]
    %v378 = vld [vmem:[%s362 + $0x78] sm:$0xff]
    %379 = vmatprep.subr.mxu0 0.0
    %380 = vmatpush1.msra.mxu0 %v378
    %381 = vmatprep.subr.mxu0 0.0
    %382 = vmatpush1.msra.mxu0 %v377
    %383 = vmatprep.subr.mxu0 0.0
    %384 = vmatpush1.msra.mxu0 %v376
    %385 = vmatprep.subr.mxu0 0.0
    %386 = vmatpush1.msra.mxu0 %v375
    %387 = vmatprep.subr.mxu0 0.0
    %388 = vmatpush1.msra.mxu0 %v374
    %389 = vmatprep.subr.mxu0 0.0
    %390 = vmatpush1.msra.mxu0 %v373
    %391 = vmatprep.subr.mxu0 0.0
    %392 = vmatpush1.msra.mxu0 %v372
    %393 = vmatprep.subr.mxu0 0.0
    %394 = vmatpush1.msra.mxu0 %v371
    %395 = vmatprep.subr.mxu0 0.0
    %396 = vmatpush1.msra.mxu0 %v370
    %397 = vmatprep.subr.mxu0 0.0
    %398 = vmatpush1.msra.mxu0 %v369
    %399 = vmatprep.subr.mxu0 0.0
    %400 = vmatpush1.msra.mxu0 %v368
    %401 = vmatprep.subr.mxu0 0.0
    %402 = vmatpush1.msra.mxu0 %v367
    %403 = vmatprep.subr.mxu0 0.0
    %404 = vmatpush1.msra.mxu0 %v366
    %405 = vmatprep.subr.mxu0 0.0
    %406 = vmatpush1.msra.mxu0 %v365
    %407 = vmatprep.subr.mxu0 0.0
    %408 = vmatpush1.msra.mxu0 %v364
    %409 = vmatprep.subr.mxu0 0.0
    %410 = vmatpush1.msra.mxu0 %v363
    %411 = vmatprep.subr.mxu0 0.0
    %412 = vmatpush2.msra.mxu0 0.0
    %413 = vmatprep.subr.mxu0 0.0
    %414 = vmatpush2.msra.mxu0 0.0
    %415 = vmatprep.subr.mxu0 0.0
    %416 = vmatpush2.msra.mxu0 0.0
    %417 = vmatprep.subr.mxu0 0.0
    %418 = vmatpush2.msra.mxu0 0.0
    %419 = vmatprep.subr.mxu0 0.0
    %420 = vmatpush2.msra.mxu0 0.0
    %421 = vmatprep.subr.mxu0 0.0
    %422 = vmatpush2.msra.mxu0 0.0
    %423 = vmatprep.subr.mxu0 0.0
    %424 = vmatpush2.msra.mxu0 0.0
    %425 = vmatprep.subr.mxu0 0.0
    %426 = vmatpush2.msra.mxu0 0.0
    %427 = vmatprep.subr.mxu0 0.0
    %428 = vmatpush2.msra.mxu0 0.0
    %429 = vmatprep.subr.mxu0 0.0
    %430 = vmatpush2.msra.mxu0 0.0
    %431 = vmatprep.subr.mxu0 0.0
    %432 = vmatpush2.msra.mxu0 0.0
    %433 = vmatprep.subr.mxu0 0.0
    %434 = vmatpush2.msra.mxu0 0.0
    %435 = vmatprep.subr.mxu0 0.0
    %436 = vmatpush2.msra.mxu0 0.0
    %437 = vmatprep.subr.mxu0 0.0
    %438 = vmatpush2.msra.mxu0 0.0
    %439 = vmatprep.subr.mxu0 0.0
    %440 = vmatpush2.msra.mxu0 0.0
    %441 = vmatprep.subr.mxu0 0.0
    %442 = vmatpush2.msra.mxu0 0.0
    %443 = vmatprep.mubr.f32.mxu0 0.0
    %444 = vmatmul.mubr.f32.gmra.mxu0 %v360
    %v445 = vpop.f32.mrf.mxu0
    %v446 = vadd.f32 0.0, %v445
    %v447 = vpop.f32.mrf.mxu0
    %448 = vmatprep.mubr.f32.mxu0 0.0
    %449 = vmatmul.mubr.f32.gmra.mxu0 %v361
    %v450 = vpop.f32.mrf.mxu0
    %v451 = vadd.f32 0.0, %v450
    %v452 = vpop.f32.mrf.mxu0
    %453 = vdwg.mxu0
    %454 = vmatprep.subr.mxu0 0.0
    %455 = vmatpush1.msra.mxu0 %v359
    %456 = vmatprep.subr.mxu0 0.0
    %457 = vmatpush1.msra.mxu0 %v358
    %458 = vmatprep.subr.mxu0 0.0
    %459 = vmatpush1.msra.mxu0 %v357
    %460 = vmatprep.subr.mxu0 0.0
    %461 = vmatpush1.msra.mxu0 %v356
    %462 = vmatprep.subr.mxu0 0.0
    %463 = vmatpush1.msra.mxu0 %v355
    %464 = vmatprep.subr.mxu0 0.0
    %465 = vmatpush1.msra.mxu0 %v354
    %466 = vmatprep.subr.mxu0 0.0
    %467 = vmatpush1.msra.mxu0 %v353
    %468 = vmatprep.subr.mxu0 0.0
    %469 = vmatpush1.msra.mxu0 %v352
    %470 = vmatprep.subr.mxu0 0.0
    %471 = vmatpush1.msra.mxu0 %v351
    %472 = vmatprep.subr.mxu0 0.0
    %473 = vmatpush1.msra.mxu0 %v350
    %474 = vmatprep.subr.mxu0 0.0
    %475 = vmatpush1.msra.mxu0 %v349
    %476 = vmatprep.subr.mxu0 0.0
    %477 = vmatpush1.msra.mxu0 %v348
    %478 = vmatprep.subr.mxu0 0.0
    %479 = vmatpush1.msra.mxu0 %v347
    %480 = vmatprep.subr.mxu0 0.0
    %481 = vmatpush1.msra.mxu0 %v346
    %482 = vmatprep.subr.mxu0 0.0
    %483 = vmatpush1.msra.mxu0 %v345
    %484 = vmatprep.subr.mxu0 0.0
    %485 = vmatpush1.msra.mxu0 %v344
    %486 = vmatprep.subr.mxu0 0.0
    %487 = vmatpush2.msra.mxu0 0.0
    %488 = vmatprep.subr.mxu0 0.0
    %489 = vmatpush2.msra.mxu0 0.0
    %490 = vmatprep.subr.mxu0 0.0
    %491 = vmatpush2.msra.mxu0 0.0
    %492 = vmatprep.subr.mxu0 0.0
    %493 = vmatpush2.msra.mxu0 0.0
    %494 = vmatprep.subr.mxu0 0.0
    %495 = vmatpush2.msra.mxu0 0.0
    %496 = vmatprep.subr.mxu0 0.0
    %497 = vmatpush2.msra.mxu0 0.0
    %498 = vmatprep.subr.mxu0 0.0
    %499 = vmatpush2.msra.mxu0 0.0
    %500 = vmatprep.subr.mxu0 0.0
    %501 = vmatpush2.msra.mxu0 0.0
    %502 = vmatprep.subr.mxu0 0.0
    %503 = vmatpush2.msra.mxu0 0.0
    %504 = vmatprep.subr.mxu0 0.0
    %505 = vmatpush2.msra.mxu0 0.0
    %506 = vmatprep.subr.mxu0 0.0
    %507 = vmatpush2.msra.mxu0 0.0
    %508 = vmatprep.subr.mxu0 0.0
    %509 = vmatpush2.msra.mxu0 0.0
    %510 = vmatprep.subr.mxu0 0.0
    %511 = vmatpush2.msra.mxu0 0.0
    %512 = vmatprep.subr.mxu0 0.0
    %513 = vmatpush2.msra.mxu0 0.0
    %514 = vmatprep.subr.mxu0 0.0
    %515 = vmatpush2.msra.mxu0 0.0
    %516 = vmatprep.subr.mxu0 0.0
    %517 = vmatpush2.msra.mxu0 0.0
    %518 = vmatprep.mubr.f32.mxu0 0.0
    %519 = vmatmul.mubr.f32.gmra.mxu0 %v342
    %v520 = vpop.f32.mrf.mxu0
    %v521 = vadd.f32 %v446, %v520
    %v522 = vpop.f32.mrf.mxu0
    %523 = vmatprep.mubr.f32.mxu0 0.0
    %524 = vmatmul.mubr.f32.gmra.mxu0 %v343
    %v525 = vpop.f32.mrf.mxu0
    %v526 = vadd.f32 %v451, %v525
    %v527 = vpop.f32.mrf.mxu0
    %528 = vdwg.mxu0
    %v529 = vld [vmem:[#allocation3 + $0x2] sm:$0xff]
    %v530 = vld [vmem:[#allocation3 + $0xa] sm:$0xff]
    %s531 = scalar_lea.vmem %s3, 256
    %v532 = vld [vmem:[%s531] sm:$0xff]
    %v533 = vld [vmem:[%s531 + $0x8] sm:$0xff]
    %v534 = vld [vmem:[%s531 + $0x10] sm:$0xff]
    %v535 = vld [vmem:[%s531 + $0x18] sm:$0xff]
    %v536 = vld [vmem:[%s531 + $0x20] sm:$0xff]
    %v537 = vld [vmem:[%s531 + $0x28] sm:$0xff]
    %v538 = vld [vmem:[%s531 + $0x30] sm:$0xff]
    %v539 = vld [vmem:[%s531 + $0x38] sm:$0xff]
    %v540 = vld [vmem:[%s531 + $0x40] sm:$0xff]
    %v541 = vld [vmem:[%s531 + $0x48] sm:$0xff]
    %v542 = vld [vmem:[%s531 + $0x50] sm:$0xff]
    %v543 = vld [vmem:[%s531 + $0x58] sm:$0xff]
    %v544 = vld [vmem:[%s531 + $0x60] sm:$0xff]
    %v545 = vld [vmem:[%s531 + $0x68] sm:$0xff]
    %v546 = vld [vmem:[%s531 + $0x70] sm:$0xff]
    %v547 = vld [vmem:[%s531 + $0x78] sm:$0xff]
    %548 = vmatprep.subr.mxu0 0.0
    %549 = vmatpush1.msra.mxu0 %v547
    %550 = vmatprep.subr.mxu0 0.0
    %551 = vmatpush1.msra.mxu0 %v546
    %552 = vmatprep.subr.mxu0 0.0
    %553 = vmatpush1.msra.mxu0 %v545
    %554 = vmatprep.subr.mxu0 0.0
    %555 = vmatpush1.msra.mxu0 %v544
    %556 = vmatprep.subr.mxu0 0.0
    %557 = vmatpush1.msra.mxu0 %v543
    %558 = vmatprep.subr.mxu0 0.0
    %559 = vmatpush1.msra.mxu0 %v542
    %560 = vmatprep.subr.mxu0 0.0
    %561 = vmatpush1.msra.mxu0 %v541
    %562 = vmatprep.subr.mxu0 0.0
    %563 = vmatpush1.msra.mxu0 %v540
    %564 = vmatprep.subr.mxu0 0.0
    %565 = vmatpush1.msra.mxu0 %v539
    %566 = vmatprep.subr.mxu0 0.0
    %567 = vmatpush1.msra.mxu0 %v538
    %568 = vmatprep.subr.mxu0 0.0
    %569 = vmatpush1.msra.mxu0 %v537
    %570 = vmatprep.subr.mxu0 0.0
    %571 = vmatpush1.msra.mxu0 %v536
    %572 = vmatprep.subr.mxu0 0.0
    %573 = vmatpush1.msra.mxu0 %v535
    %574 = vmatprep.subr.mxu0 0.0
    %575 = vmatpush1.msra.mxu0 %v534
    %576 = vmatprep.subr.mxu0 0.0
    %577 = vmatpush1.msra.mxu0 %v533
    %578 = vmatprep.subr.mxu0 0.0
    %579 = vmatpush1.msra.mxu0 %v532
    %580 = vmatprep.subr.mxu0 0.0
    %581 = vmatpush2.msra.mxu0 0.0
    %582 = vmatprep.subr.mxu0 0.0
    %583 = vmatpush2.msra.mxu0 0.0
    %584 = vmatprep.subr.mxu0 0.0
    %585 = vmatpush2.msra.mxu0 0.0
    %586 = vmatprep.subr.mxu0 0.0
    %587 = vmatpush2.msra.mxu0 0.0
    %588 = vmatprep.subr.mxu0 0.0
    %589 = vmatpush2.msra.mxu0 0.0
    %590 = vmatprep.subr.mxu0 0.0
    %591 = vmatpush2.msra.mxu0 0.0
    %592 = vmatprep.subr.mxu0 0.0
    %593 = vmatpush2.msra.mxu0 0.0
    %594 = vmatprep.subr.mxu0 0.0
    %595 = vmatpush2.msra.mxu0 0.0
    %596 = vmatprep.subr.mxu0 0.0
    %597 = vmatpush2.msra.mxu0 0.0
    %598 = vmatprep.subr.mxu0 0.0
    %599 = vmatpush2.msra.mxu0 0.0
    %600 = vmatprep.subr.mxu0 0.0
    %601 = vmatpush2.msra.mxu0 0.0
    %602 = vmatprep.subr.mxu0 0.0
    %603 = vmatpush2.msra.mxu0 0.0
    %604 = vmatprep.subr.mxu0 0.0
    %605 = vmatpush2.msra.mxu0 0.0
    %606 = vmatprep.subr.mxu0 0.0
    %607 = vmatpush2.msra.mxu0 0.0
    %608 = vmatprep.subr.mxu0 0.0
    %609 = vmatpush2.msra.mxu0 0.0
    %610 = vmatprep.subr.mxu0 0.0
    %611 = vmatpush2.msra.mxu0 0.0
    %612 = vmatprep.mubr.f32.mxu0 0.0
    %613 = vmatmul.mubr.f32.gmra.mxu0 %v529
    %v614 = vpop.f32.mrf.mxu0
    %v615 = vadd.f32 0.0, %v614
    %v616 = vpop.f32.mrf.mxu0
    %617 = vmatprep.mubr.f32.mxu0 0.0
    %618 = vmatmul.mubr.f32.gmra.mxu0 %v530
    %v619 = vpop.f32.mrf.mxu0
    %v620 = vadd.f32 0.0, %v619
    %v621 = vpop.f32.mrf.mxu0
    %622 = vdwg.mxu0
    %v623 = vadd.f32 %v521, %v615
    %v624 = vadd.f32 %v526, %v620
    %v625 = vld [vmem:[%s4] sm:$0x1]
    %v627 = vlaneseq
    %v628 = vshrl.u32 %v627, 7
    %v629 = vsub.s32 0, %v628
    %v630 = vrot.slane %v625, %v629
    %v632 = vadd.f32 %v623, %v630
    %v633 = vadd.f32 %v624, %v630
    %v634 = vmax.f32 %v632, 0.0
    %v635 = vmax.f32 %v633, 0.0
    %636 = vst [vmem:[%s5] sm:$0xff] %v634
    %637 = vst [vmem:[%s5 + $0x8] sm:$0xff] %v635
    %s638 = scalar_lea.vmem [#allocation2], 24
    %v639 = vld [vmem:[%s638] sm:$0xff]
    %v640 = vld [vmem:[%s638 + $0x8] sm:$0xff]
    %v641 = vld [vmem:[#allocation4] sm:$0xff]
    %v642 = vld [vmem:[#allocation4 + $0x8] sm:$0xff]
    %v643 = vld [vmem:[#allocation4 + $0x10] sm:$0xff]
    %v644 = vld [vmem:[#allocation4 + $0x18] sm:$0xff]
    %v645 = vld [vmem:[#allocation4 + $0x20] sm:$0xff]
    %v646 = vld [vmem:[#allocation4 + $0x28] sm:$0xff]
    %v647 = vld [vmem:[#allocation4 + $0x30] sm:$0xff]
    %v648 = vld [vmem:[#allocation4 + $0x38] sm:$0xff]
    %v649 = vld [vmem:[%s638 + $0x1] sm:$0xff]
    %v650 = vld [vmem:[%s638 + $0x9] sm:$0xff]
    %v651 = vld [vmem:[%s64] sm:$0xff]
    %v652 = vld [vmem:[%s64 + $0x8] sm:$0xff]
    %v653 = vld [vmem:[%s64 + $0x10] sm:$0xff]
    %v654 = vld [vmem:[%s64 + $0x18] sm:$0xff]
    %v655 = vld [vmem:[%s64 + $0x20] sm:$0xff]
    %v656 = vld [vmem:[%s64 + $0x28] sm:$0xff]
    %v657 = vld [vmem:[%s64 + $0x30] sm:$0xff]
    %v658 = vld [vmem:[%s64 + $0x38] sm:$0xff]
    %v660 = vsel %vm47, %v649, 0
    %v663 = vsel %vm47, %v650, 0
    %665 = vmatprep.subr.mxu0 0.0
    %666 = vmatpush1.msra.mxu0 0.0
    %667 = vmatprep.subr.mxu0 0.0
    %668 = vmatpush1.msra.mxu0 0.0
    %669 = vmatprep.subr.mxu0 0.0
    %670 = vmatpush1.msra.mxu0 0.0
    %671 = vmatprep.subr.mxu0 0.0
    %672 = vmatpush1.msra.mxu0 0.0
    %673 = vmatprep.subr.mxu0 0.0
    %674 = vmatpush1.msra.mxu0 0.0
    %675 = vmatprep.subr.mxu0 0.0
    %676 = vmatpush1.msra.mxu0 0.0
    %677 = vmatprep.subr.mxu0 0.0
    %678 = vmatpush1.msra.mxu0 0.0
    %679 = vmatprep.subr.mxu0 0.0
    %680 = vmatpush1.msra.mxu0 0.0
    %681 = vmatprep.subr.mxu0 0.0
    %682 = vmatpush1.msra.mxu0 %v658
    %683 = vmatprep.subr.mxu0 0.0
    %684 = vmatpush1.msra.mxu0 %v657
    %685 = vmatprep.subr.mxu0 0.0
    %686 = vmatpush1.msra.mxu0 %v656
    %687 = vmatprep.subr.mxu0 0.0
    %688 = vmatpush1.msra.mxu0 %v655
    %689 = vmatprep.subr.mxu0 0.0
    %690 = vmatpush1.msra.mxu0 %v654
    %691 = vmatprep.subr.mxu0 0.0
    %692 = vmatpush1.msra.mxu0 %v653
    %693 = vmatprep.subr.mxu0 0.0
    %694 = vmatpush1.msra.mxu0 %v652
    %695 = vmatprep.subr.mxu0 0.0
    %696 = vmatpush1.msra.mxu0 %v651
    %697 = vmatprep.subr.mxu0 0.0
    %698 = vmatpush2.msra.mxu0 0.0
    %699 = vmatprep.subr.mxu0 0.0
    %700 = vmatpush2.msra.mxu0 0.0
    %701 = vmatprep.subr.mxu0 0.0
    %702 = vmatpush2.msra.mxu0 0.0
    %703 = vmatprep.subr.mxu0 0.0
    %704 = vmatpush2.msra.mxu0 0.0
    %705 = vmatprep.subr.mxu0 0.0
    %706 = vmatpush2.msra.mxu0 0.0
    %707 = vmatprep.subr.mxu0 0.0
    %708 = vmatpush2.msra.mxu0 0.0
    %709 = vmatprep.subr.mxu0 0.0
    %710 = vmatpush2.msra.mxu0 0.0
    %711 = vmatprep.subr.mxu0 0.0
    %712 = vmatpush2.msra.mxu0 0.0
    %713 = vmatprep.subr.mxu0 0.0
    %714 = vmatpush2.msra.mxu0 0.0
    %715 = vmatprep.subr.mxu0 0.0
    %716 = vmatpush2.msra.mxu0 0.0
    %717 = vmatprep.subr.mxu0 0.0
    %718 = vmatpush2.msra.mxu0 0.0
    %719 = vmatprep.subr.mxu0 0.0
    %720 = vmatpush2.msra.mxu0 0.0
    %721 = vmatprep.subr.mxu0 0.0
    %722 = vmatpush2.msra.mxu0 0.0
    %723 = vmatprep.subr.mxu0 0.0
    %724 = vmatpush2.msra.mxu0 0.0
    %725 = vmatprep.subr.mxu0 0.0
    %726 = vmatpush2.msra.mxu0 0.0
    %727 = vmatprep.subr.mxu0 0.0
    %728 = vmatpush2.msra.mxu0 0.0
    %729 = vmatprep.mubr.f32.mxu0 0.0
    %730 = vmatmul.mubr.f32.gmra.mxu0 %v660
    %v731 = vpop.f32.mrf.mxu0
    %v732 = vadd.f32 0.0, %v731
    %v733 = vpop.f32.mrf.mxu0
    %734 = vmatprep.mubr.f32.mxu0 0.0
    %735 = vmatmul.mubr.f32.gmra.mxu0 %v663
    %v736 = vpop.f32.mrf.mxu0
    %v737 = vadd.f32 0.0, %v736
    %v738 = vpop.f32.mrf.mxu0
    %739 = vdwg.mxu0
    %v741 = vsel %vm47, %v639, 0
    %v744 = vsel %vm47, %v640, 0
    %746 = vmatprep.subr.mxu0 0.0
    %747 = vmatpush1.msra.mxu0 0.0
    %748 = vmatprep.subr.mxu0 0.0
    %749 = vmatpush1.msra.mxu0 0.0
    %750 = vmatprep.subr.mxu0 0.0
    %751 = vmatpush1.msra.mxu0 0.0
    %752 = vmatprep.subr.mxu0 0.0
    %753 = vmatpush1.msra.mxu0 0.0
    %754 = vmatprep.subr.mxu0 0.0
    %755 = vmatpush1.msra.mxu0 0.0
    %756 = vmatprep.subr.mxu0 0.0
    %757 = vmatpush1.msra.mxu0 0.0
    %758 = vmatprep.subr.mxu0 0.0
    %759 = vmatpush1.msra.mxu0 0.0
    %760 = vmatprep.subr.mxu0 0.0
    %761 = vmatpush1.msra.mxu0 0.0
    %762 = vmatprep.subr.mxu0 0.0
    %763 = vmatpush1.msra.mxu0 %v648
    %764 = vmatprep.subr.mxu0 0.0
    %765 = vmatpush1.msra.mxu0 %v647
    %766 = vmatprep.subr.mxu0 0.0
    %767 = vmatpush1.msra.mxu0 %v646
    %768 = vmatprep.subr.mxu0 0.0
    %769 = vmatpush1.msra.mxu0 %v645
    %770 = vmatprep.subr.mxu0 0.0
    %771 = vmatpush1.msra.mxu0 %v644
    %772 = vmatprep.subr.mxu0 0.0
    %773 = vmatpush1.msra.mxu0 %v643
    %774 = vmatprep.subr.mxu0 0.0
    %775 = vmatpush1.msra.mxu0 %v642
    %776 = vmatprep.subr.mxu0 0.0
    %777 = vmatpush1.msra.mxu0 %v641
    %778 = vmatprep.subr.mxu0 0.0
    %779 = vmatpush2.msra.mxu0 0.0
    %780 = vmatprep.subr.mxu0 0.0
    %781 = vmatpush2.msra.mxu0 0.0
    %782 = vmatprep.subr.mxu0 0.0
    %783 = vmatpush2.msra.mxu0 0.0
    %784 = vmatprep.subr.mxu0 0.0
    %785 = vmatpush2.msra.mxu0 0.0
    %786 = vmatprep.subr.mxu0 0.0
    %787 = vmatpush2.msra.mxu0 0.0
    %788 = vmatprep.subr.mxu0 0.0
    %789 = vmatpush2.msra.mxu0 0.0
    %790 = vmatprep.subr.mxu0 0.0
    %791 = vmatpush2.msra.mxu0 0.0
    %792 = vmatprep.subr.mxu0 0.0
    %793 = vmatpush2.msra.mxu0 0.0
    %794 = vmatprep.subr.mxu0 0.0
    %795 = vmatpush2.msra.mxu0 0.0
    %796 = vmatprep.subr.mxu0 0.0
    %797 = vmatpush2.msra.mxu0 0.0
    %798 = vmatprep.subr.mxu0 0.0
    %799 = vmatpush2.msra.mxu0 0.0
    %800 = vmatprep.subr.mxu0 0.0
    %801 = vmatpush2.msra.mxu0 0.0
    %802 = vmatprep.subr.mxu0 0.0
    %803 = vmatpush2.msra.mxu0 0.0
    %804 = vmatprep.subr.mxu0 0.0
    %805 = vmatpush2.msra.mxu0 0.0
    %806 = vmatprep.subr.mxu0 0.0
    %807 = vmatpush2.msra.mxu0 0.0
    %808 = vmatprep.subr.mxu0 0.0
    %809 = vmatpush2.msra.mxu0 0.0
    %810 = vmatprep.mubr.f32.mxu0 0.0
    %811 = vmatmul.mubr.f32.gmra.mxu0 %v741
    %v812 = vpop.f32.mrf.mxu0
    %v813 = vadd.f32 %v732, %v812
    %v814 = vpop.f32.mrf.mxu0
    %815 = vmatprep.mubr.f32.mxu0 0.0
    %816 = vmatmul.mubr.f32.gmra.mxu0 %v744
    %v817 = vpop.f32.mrf.mxu0
    %v818 = vadd.f32 %v737, %v817
    %v819 = vpop.f32.mrf.mxu0
    %820 = vdwg.mxu0
    %v821 = vld [vmem:[%s638 + $0x2] sm:$0xff]
    %v822 = vld [vmem:[%s638 + $0xa] sm:$0xff]
    %v823 = vld [vmem:[%s237] sm:$0xff]
    %v824 = vld [vmem:[%s237 + $0x8] sm:$0xff]
    %v825 = vld [vmem:[%s237 + $0x10] sm:$0xff]
    %v826 = vld [vmem:[%s237 + $0x18] sm:$0xff]
    %v827 = vld [vmem:[%s237 + $0x20] sm:$0xff]
    %v828 = vld [vmem:[%s237 + $0x28] sm:$0xff]
    %v829 = vld [vmem:[%s237 + $0x30] sm:$0xff]
    %v830 = vld [vmem:[%s237 + $0x38] sm:$0xff]
    %v832 = vsel %vm47, %v821, 0
    %v835 = vsel %vm47, %v822, 0
    %837 = vmatprep.subr.mxu0 0.0
    %838 = vmatpush1.msra.mxu0 0.0
    %839 = vmatprep.subr.mxu0 0.0
    %840 = vmatpush1.msra.mxu0 0.0
    %841 = vmatprep.subr.mxu0 0.0
    %842 = vmatpush1.msra.mxu0 0.0
    %843 = vmatprep.subr.mxu0 0.0
    %844 = vmatpush1.msra.mxu0 0.0
    %845 = vmatprep.subr.mxu0 0.0
    %846 = vmatpush1.msra.mxu0 0.0
    %847 = vmatprep.subr.mxu0 0.0
    %848 = vmatpush1.msra.mxu0 0.0
    %849 = vmatprep.subr.mxu0 0.0
    %850 = vmatpush1.msra.mxu0 0.0
    %851 = vmatprep.subr.mxu0 0.0
    %852 = vmatpush1.msra.mxu0 0.0
    %853 = vmatprep.subr.mxu0 0.0
    %854 = vmatpush1.msra.mxu0 %v830
    %855 = vmatprep.subr.mxu0 0.0
    %856 = vmatpush1.msra.mxu0 %v829
    %857 = vmatprep.subr.mxu0 0.0
    %858 = vmatpush1.msra.mxu0 %v828
    %859 = vmatprep.subr.mxu0 0.0
    %860 = vmatpush1.msra.mxu0 %v827
    %861 = vmatprep.subr.mxu0 0.0
    %862 = vmatpush1.msra.mxu0 %v826
    %863 = vmatprep.subr.mxu0 0.0
    %864 = vmatpush1.msra.mxu0 %v825
    %865 = vmatprep.subr.mxu0 0.0
    %866 = vmatpush1.msra.mxu0 %v824
    %867 = vmatprep.subr.mxu0 0.0
    %868 = vmatpush1.msra.mxu0 %v823
    %869 = vmatprep.subr.mxu0 0.0
    %870 = vmatpush2.msra.mxu0 0.0
    %871 = vmatprep.subr.mxu0 0.0
    %872 = vmatpush2.msra.mxu0 0.0
    %873 = vmatprep.subr.mxu0 0.0
    %874 = vmatpush2.msra.mxu0 0.0
    %875 = vmatprep.subr.mxu0 0.0
    %876 = vmatpush2.msra.mxu0 0.0
    %877 = vmatprep.subr.mxu0 0.0
    %878 = vmatpush2.msra.mxu0 0.0
    %879 = vmatprep.subr.mxu0 0.0
    %880 = vmatpush2.msra.mxu0 0.0
    %881 = vmatprep.subr.mxu0 0.0
    %882 = vmatpush2.msra.mxu0 0.0
    %883 = vmatprep.subr.mxu0 0.0
    %884 = vmatpush2.msra.mxu0 0.0
    %885 = vmatprep.subr.mxu0 0.0
    %886 = vmatpush2.msra.mxu0 0.0
    %887 = vmatprep.subr.mxu0 0.0
    %888 = vmatpush2.msra.mxu0 0.0
    %889 = vmatprep.subr.mxu0 0.0
    %890 = vmatpush2.msra.mxu0 0.0
    %891 = vmatprep.subr.mxu0 0.0
    %892 = vmatpush2.msra.mxu0 0.0
    %893 = vmatprep.subr.mxu0 0.0
    %894 = vmatpush2.msra.mxu0 0.0
    %895 = vmatprep.subr.mxu0 0.0
    %896 = vmatpush2.msra.mxu0 0.0
    %897 = vmatprep.subr.mxu0 0.0
    %898 = vmatpush2.msra.mxu0 0.0
    %899 = vmatprep.subr.mxu0 0.0
    %900 = vmatpush2.msra.mxu0 0.0
    %901 = vmatprep.mubr.f32.mxu0 0.0
    %902 = vmatmul.mubr.f32.gmra.mxu0 %v832
    %v903 = vpop.f32.mrf.mxu0
    %v904 = vadd.f32 0.0, %v903
    %v905 = vpop.f32.mrf.mxu0
    %906 = vmatprep.mubr.f32.mxu0 0.0
    %907 = vmatmul.mubr.f32.gmra.mxu0 %v835
    %v908 = vpop.f32.mrf.mxu0
    %v909 = vadd.f32 0.0, %v908
    %v910 = vpop.f32.mrf.mxu0
    %911 = vdwg.mxu0
    %v912 = vadd.f32 %v813, %v904
    %v913 = vadd.f32 %v818, %v909
    %v914 = vld [vmem:[%s2] sm:$0x1]
    %v916 = vlaneseq
    %v917 = vshrl.u32 %v916, 7
    %v918 = vsub.s32 0, %v917
    %v919 = vrot.slane %v914, %v918
    %v921 = vadd.f32 %v912, %v919
    %v922 = vadd.f32 %v913, %v919
    %v923 = vmax.f32 %v921, 0.0
    %v924 = vmax.f32 %v922, 0.0
    %s925 = scalar_lea.vmem [#allocation3], 24
    %926 = vst [vmem:[%s925 + $0x1] sm:$0xff] %v923
    %927 = vst [vmem:[%s925 + $0x9] sm:$0xff] %v924
    %v928 = vld [vmem:[%s925] sm:$0xff]
    %v929 = vld [vmem:[%s925 + $0x8] sm:$0xff]
    %v930 = vld [vmem:[%s3] sm:$0xff]
    %v931 = vld [vmem:[%s3 + $0x8] sm:$0xff]
    %v932 = vld [vmem:[%s3 + $0x10] sm:$0xff]
    %v933 = vld [vmem:[%s3 + $0x18] sm:$0xff]
    %v934 = vld [vmem:[%s3 + $0x20] sm:$0xff]
    %v935 = vld [vmem:[%s3 + $0x28] sm:$0xff]
    %v936 = vld [vmem:[%s3 + $0x30] sm:$0xff]
    %v937 = vld [vmem:[%s3 + $0x38] sm:$0xff]
    %v938 = vld [vmem:[%s3 + $0x40] sm:$0xff]
    %v939 = vld [vmem:[%s3 + $0x48] sm:$0xff]
    %v940 = vld [vmem:[%s3 + $0x50] sm:$0xff]
    %v941 = vld [vmem:[%s3 + $0x58] sm:$0xff]
    %v942 = vld [vmem:[%s3 + $0x60] sm:$0xff]
    %v943 = vld [vmem:[%s3 + $0x68] sm:$0xff]
    %v944 = vld [vmem:[%s3 + $0x70] sm:$0xff]
    %v945 = vld [vmem:[%s3 + $0x78] sm:$0xff]
    %v946 = vld [vmem:[%s925 + $0x1] sm:$0xff]
    %v947 = vld [vmem:[%s925 + $0x9] sm:$0xff]
    %v948 = vld [vmem:[%s362] sm:$0xff]
    %v949 = vld [vmem:[%s362 + $0x8] sm:$0xff]
    %v950 = vld [vmem:[%s362 + $0x10] sm:$0xff]
    %v951 = vld [vmem:[%s362 + $0x18] sm:$0xff]
    %v952 = vld [vmem:[%s362 + $0x20] sm:$0xff]
    %v953 = vld [vmem:[%s362 + $0x28] sm:$0xff]
    %v954 = vld [vmem:[%s362 + $0x30] sm:$0xff]
    %v955 = vld [vmem:[%s362 + $0x38] sm:$0xff]
    %v956 = vld [vmem:[%s362 + $0x40] sm:$0xff]
    %v957 = vld [vmem:[%s362 + $0x48] sm:$0xff]
    %v958 = vld [vmem:[%s362 + $0x50] sm:$0xff]
    %v959 = vld [vmem:[%s362 + $0x58] sm:$0xff]
    %v960 = vld [vmem:[%s362 + $0x60] sm:$0xff]
    %v961 = vld [vmem:[%s362 + $0x68] sm:$0xff]
    %v962 = vld [vmem:[%s362 + $0x70] sm:$0xff]
    %v963 = vld [vmem:[%s362 + $0x78] sm:$0xff]
    %964 = vmatprep.subr.mxu0 0.0
    %965 = vmatpush1.msra.mxu0 %v963
    %966 = vmatprep.subr.mxu0 0.0
    %967 = vmatpush1.msra.mxu0 %v962
    %968 = vmatprep.subr.mxu0 0.0
    %969 = vmatpush1.msra.mxu0 %v961
    %970 = vmatprep.subr.mxu0 0.0
    %971 = vmatpush1.msra.mxu0 %v960
    %972 = vmatprep.subr.mxu0 0.0
    %973 = vmatpush1.msra.mxu0 %v959
    %974 = vmatprep.subr.mxu0 0.0
    %975 = vmatpush1.msra.mxu0 %v958
    %976 = vmatprep.subr.mxu0 0.0
    %977 = vmatpush1.msra.mxu0 %v957
    %978 = vmatprep.subr.mxu0 0.0
    %979 = vmatpush1.msra.mxu0 %v956
    %980 = vmatprep.subr.mxu0 0.0
    %981 = vmatpush1.msra.mxu0 %v955
    %982 = vmatprep.subr.mxu0 0.0
    %983 = vmatpush1.msra.mxu0 %v954
    %984 = vmatprep.subr.mxu0 0.0
    %985 = vmatpush1.msra.mxu0 %v953
    %986 = vmatprep.subr.mxu0 0.0
    %987 = vmatpush1.msra.mxu0 %v952
    %988 = vmatprep.subr.mxu0 0.0
    %989 = vmatpush1.msra.mxu0 %v951
    %990 = vmatprep.subr.mxu0 0.0
    %991 = vmatpush1.msra.mxu0 %v950
    %992 = vmatprep.subr.mxu0 0.0
    %993 = vmatpush1.msra.mxu0 %v949
    %994 = vmatprep.subr.mxu0 0.0
    %995 = vmatpush1.msra.mxu0 %v948
    %996 = vmatprep.subr.mxu0 0.0
    %997 = vmatpush2.msra.mxu0 0.0
    %998 = vmatprep.subr.mxu0 0.0
    %999 = vmatpush2.msra.mxu0 0.0
    %1000 = vmatprep.subr.mxu0 0.0
    %1001 = vmatpush2.msra.mxu0 0.0
    %1002 = vmatprep.subr.mxu0 0.0
    %1003 = vmatpush2.msra.mxu0 0.0
    %1004 = vmatprep.subr.mxu0 0.0
    %1005 = vmatpush2.msra.mxu0 0.0
    %1006 = vmatprep.subr.mxu0 0.0
    %1007 = vmatpush2.msra.mxu0 0.0
    %1008 = vmatprep.subr.mxu0 0.0
    %1009 = vmatpush2.msra.mxu0 0.0
    %1010 = vmatprep.subr.mxu0 0.0
    %1011 = vmatpush2.msra.mxu0 0.0
    %1012 = vmatprep.subr.mxu0 0.0
    %1013 = vmatpush2.msra.mxu0 0.0
    %1014 = vmatprep.subr.mxu0 0.0
    %1015 = vmatpush2.msra.mxu0 0.0
    %1016 = vmatprep.subr.mxu0 0.0
    %1017 = vmatpush2.msra.mxu0 0.0
    %1018 = vmatprep.subr.mxu0 0.0
    %1019 = vmatpush2.msra.mxu0 0.0
    %1020 = vmatprep.subr.mxu0 0.0
    %1021 = vmatpush2.msra.mxu0 0.0
    %1022 = vmatprep.subr.mxu0 0.0
    %1023 = vmatpush2.msra.mxu0 0.0
    %1024 = vmatprep.subr.mxu0 0.0
    %1025 = vmatpush2.msra.mxu0 0.0
    %1026 = vmatprep.subr.mxu0 0.0
    %1027 = vmatpush2.msra.mxu0 0.0
    %1028 = vmatprep.mubr.f32.mxu0 0.0
    %1029 = vmatmul.mubr.f32.gmra.mxu0 %v946
    %v1030 = vpop.f32.mrf.mxu0
    %v1031 = vadd.f32 0.0, %v1030
    %v1032 = vpop.f32.mrf.mxu0
    %1033 = vmatprep.mubr.f32.mxu0 0.0
    %1034 = vmatmul.mubr.f32.gmra.mxu0 %v947
    %v1035 = vpop.f32.mrf.mxu0
    %v1036 = vadd.f32 0.0, %v1035
    %v1037 = vpop.f32.mrf.mxu0
    %1038 = vdwg.mxu0
    %1039 = vmatprep.subr.mxu0 0.0
    %1040 = vmatpush1.msra.mxu0 %v945
    %1041 = vmatprep.subr.mxu0 0.0
    %1042 = vmatpush1.msra.mxu0 %v944
    %1043 = vmatprep.subr.mxu0 0.0
    %1044 = vmatpush1.msra.mxu0 %v943
    %1045 = vmatprep.subr.mxu0 0.0
    %1046 = vmatpush1.msra.mxu0 %v942
    %1047 = vmatprep.subr.mxu0 0.0
    %1048 = vmatpush1.msra.mxu0 %v941
    %1049 = vmatprep.subr.mxu0 0.0
    %1050 = vmatpush1.msra.mxu0 %v940
    %1051 = vmatprep.subr.mxu0 0.0
    %1052 = vmatpush1.msra.mxu0 %v939
    %1053 = vmatprep.subr.mxu0 0.0
    %1054 = vmatpush1.msra.mxu0 %v938
    %1055 = vmatprep.subr.mxu0 0.0
    %1056 = vmatpush1.msra.mxu0 %v937
    %1057 = vmatprep.subr.mxu0 0.0
    %1058 = vmatpush1.msra.mxu0 %v936
    %1059 = vmatprep.subr.mxu0 0.0
    %1060 = vmatpush1.msra.mxu0 %v935
    %1061 = vmatprep.subr.mxu0 0.0
    %1062 = vmatpush1.msra.mxu0 %v934
    %1063 = vmatprep.subr.mxu0 0.0
    %1064 = vmatpush1.msra.mxu0 %v933
    %1065 = vmatprep.subr.mxu0 0.0
    %1066 = vmatpush1.msra.mxu0 %v932
    %1067 = vmatprep.subr.mxu0 0.0
    %1068 = vmatpush1.msra.mxu0 %v931
    %1069 = vmatprep.subr.mxu0 0.0
    %1070 = vmatpush1.msra.mxu0 %v930
    %1071 = vmatprep.subr.mxu0 0.0
    %1072 = vmatpush2.msra.mxu0 0.0
    %1073 = vmatprep.subr.mxu0 0.0
    %1074 = vmatpush2.msra.mxu0 0.0
    %1075 = vmatprep.subr.mxu0 0.0
    %1076 = vmatpush2.msra.mxu0 0.0
    %1077 = vmatprep.subr.mxu0 0.0
    %1078 = vmatpush2.msra.mxu0 0.0
    %1079 = vmatprep.subr.mxu0 0.0
    %1080 = vmatpush2.msra.mxu0 0.0
    %1081 = vmatprep.subr.mxu0 0.0
    %1082 = vmatpush2.msra.mxu0 0.0
    %1083 = vmatprep.subr.mxu0 0.0
    %1084 = vmatpush2.msra.mxu0 0.0
    %1085 = vmatprep.subr.mxu0 0.0
    %1086 = vmatpush2.msra.mxu0 0.0
    %1087 = vmatprep.subr.mxu0 0.0
    %1088 = vmatpush2.msra.mxu0 0.0
    %1089 = vmatprep.subr.mxu0 0.0
    %1090 = vmatpush2.msra.mxu0 0.0
    %1091 = vmatprep.subr.mxu0 0.0
    %1092 = vmatpush2.msra.mxu0 0.0
    %1093 = vmatprep.subr.mxu0 0.0
    %1094 = vmatpush2.msra.mxu0 0.0
    %1095 = vmatprep.subr.mxu0 0.0
    %1096 = vmatpush2.msra.mxu0 0.0
    %1097 = vmatprep.subr.mxu0 0.0
    %1098 = vmatpush2.msra.mxu0 0.0
    %1099 = vmatprep.subr.mxu0 0.0
    %1100 = vmatpush2.msra.mxu0 0.0
    %1101 = vmatprep.subr.mxu0 0.0
    %1102 = vmatpush2.msra.mxu0 0.0
    %1103 = vmatprep.mubr.f32.mxu0 0.0
    %1104 = vmatmul.mubr.f32.gmra.mxu0 %v928
    %v1105 = vpop.f32.mrf.mxu0
    %v1106 = vadd.f32 %v1031, %v1105
    %v1107 = vpop.f32.mrf.mxu0
    %1108 = vmatprep.mubr.f32.mxu0 0.0
    %1109 = vmatmul.mubr.f32.gmra.mxu0 %v929
    %v1110 = vpop.f32.mrf.mxu0
    %v1111 = vadd.f32 %v1036, %v1110
    %v1112 = vpop.f32.mrf.mxu0
    %1113 = vdwg.mxu0
    %v1114 = vld [vmem:[%s925 + $0x2] sm:$0xff]
    %v1115 = vld [vmem:[%s925 + $0xa] sm:$0xff]
    %v1116 = vld [vmem:[%s531] sm:$0xff]
    %v1117 = vld [vmem:[%s531 + $0x8] sm:$0xff]
    %v1118 = vld [vmem:[%s531 + $0x10] sm:$0xff]
    %v1119 = vld [vmem:[%s531 + $0x18] sm:$0xff]
    %v1120 = vld [vmem:[%s531 + $0x20] sm:$0xff]
    %v1121 = vld [vmem:[%s531 + $0x28] sm:$0xff]
    %v1122 = vld [vmem:[%s531 + $0x30] sm:$0xff]
    %v1123 = vld [vmem:[%s531 + $0x38] sm:$0xff]
    %v1124 = vld [vmem:[%s531 + $0x40] sm:$0xff]
    %v1125 = vld [vmem:[%s531 + $0x48] sm:$0xff]
    %v1126 = vld [vmem:[%s531 + $0x50] sm:$0xff]
    %v1127 = vld [vmem:[%s531 + $0x58] sm:$0xff]
    %v1128 = vld [vmem:[%s531 + $0x60] sm:$0xff]
    %v1129 = vld [vmem:[%s531 + $0x68] sm:$0xff]
    %v1130 = vld [vmem:[%s531 + $0x70] sm:$0xff]
    %v1131 = vld [vmem:[%s531 + $0x78] sm:$0xff]
    %1132 = vmatprep.subr.mxu0 0.0
    %1133 = vmatpush1.msra.mxu0 %v1131
    %1134 = vmatprep.subr.mxu0 0.0
    %1135 = vmatpush1.msra.mxu0 %v1130
    %1136 = vmatprep.subr.mxu0 0.0
    %1137 = vmatpush1.msra.mxu0 %v1129
    %1138 = vmatprep.subr.mxu0 0.0
    %1139 = vmatpush1.msra.mxu0 %v1128
    %1140 = vmatprep.subr.mxu0 0.0
    %1141 = vmatpush1.msra.mxu0 %v1127
    %1142 = vmatprep.subr.mxu0 0.0
    %1143 = vmatpush1.msra.mxu0 %v1126
    %1144 = vmatprep.subr.mxu0 0.0
    %1145 = vmatpush1.msra.mxu0 %v1125
    %1146 = vmatprep.subr.mxu0 0.0
    %1147 = vmatpush1.msra.mxu0 %v1124
    %1148 = vmatprep.subr.mxu0 0.0
    %1149 = vmatpush1.msra.mxu0 %v1123
    %1150 = vmatprep.subr.mxu0 0.0
    %1151 = vmatpush1.msra.mxu0 %v1122
    %1152 = vmatprep.subr.mxu0 0.0
    %1153 = vmatpush1.msra.mxu0 %v1121
    %1154 = vmatprep.subr.mxu0 0.0
    %1155 = vmatpush1.msra.mxu0 %v1120
    %1156 = vmatprep.subr.mxu0 0.0
    %1157 = vmatpush1.msra.mxu0 %v1119
    %1158 = vmatprep.subr.mxu0 0.0
    %1159 = vmatpush1.msra.mxu0 %v1118
    %1160 = vmatprep.subr.mxu0 0.0
    %1161 = vmatpush1.msra.mxu0 %v1117
    %1162 = vmatprep.subr.mxu0 0.0
    %1163 = vmatpush1.msra.mxu0 %v1116
    %1164 = vmatprep.subr.mxu0 0.0
    %1165 = vmatpush2.msra.mxu0 0.0
    %1166 = vmatprep.subr.mxu0 0.0
    %1167 = vmatpush2.msra.mxu0 0.0
    %1168 = vmatprep.subr.mxu0 0.0
    %1169 = vmatpush2.msra.mxu0 0.0
    %1170 = vmatprep.subr.mxu0 0.0
    %1171 = vmatpush2.msra.mxu0 0.0
    %1172 = vmatprep.subr.mxu0 0.0
    %1173 = vmatpush2.msra.mxu0 0.0
    %1174 = vmatprep.subr.mxu0 0.0
    %1175 = vmatpush2.msra.mxu0 0.0
    %1176 = vmatprep.subr.mxu0 0.0
    %1177 = vmatpush2.msra.mxu0 0.0
    %1178 = vmatprep.subr.mxu0 0.0
    %1179 = vmatpush2.msra.mxu0 0.0
    %1180 = vmatprep.subr.mxu0 0.0
    %1181 = vmatpush2.msra.mxu0 0.0
    %1182 = vmatprep.subr.mxu0 0.0
    %1183 = vmatpush2.msra.mxu0 0.0
    %1184 = vmatprep.subr.mxu0 0.0
    %1185 = vmatpush2.msra.mxu0 0.0
    %1186 = vmatprep.subr.mxu0 0.0
    %1187 = vmatpush2.msra.mxu0 0.0
    %1188 = vmatprep.subr.mxu0 0.0
    %1189 = vmatpush2.msra.mxu0 0.0
    %1190 = vmatprep.subr.mxu0 0.0
    %1191 = vmatpush2.msra.mxu0 0.0
    %1192 = vmatprep.subr.mxu0 0.0
    %1193 = vmatpush2.msra.mxu0 0.0
    %1194 = vmatprep.subr.mxu0 0.0
    %1195 = vmatpush2.msra.mxu0 0.0
    %1196 = vmatprep.mubr.f32.mxu0 0.0
    %1197 = vmatmul.mubr.f32.gmra.mxu0 %v1114
    %v1198 = vpop.f32.mrf.mxu0
    %v1199 = vadd.f32 0.0, %v1198
    %v1200 = vpop.f32.mrf.mxu0
    %1201 = vmatprep.mubr.f32.mxu0 0.0
    %1202 = vmatmul.mubr.f32.gmra.mxu0 %v1115
    %v1203 = vpop.f32.mrf.mxu0
    %v1204 = vadd.f32 0.0, %v1203
    %v1205 = vpop.f32.mrf.mxu0
    %1206 = vdwg.mxu0
    %v1207 = vadd.f32 %v1106, %v1199
    %v1208 = vadd.f32 %v1111, %v1204
    %v1209 = vld [vmem:[%s4] sm:$0x1]
    %v1211 = vlaneseq
    %v1212 = vshrl.u32 %v1211, 7
    %v1213 = vsub.s32 0, %v1212
    %v1214 = vrot.slane %v1209, %v1213
    %v1216 = vadd.f32 %v1207, %v1214
    %v1217 = vadd.f32 %v1208, %v1214
    %v1218 = vmax.f32 %v1216, 0.0
    %v1219 = vmax.f32 %v1217, 0.0
    %s1220 = scalar_lea.vmem %s5, 16
    %1221 = vst [vmem:[%s1220] sm:$0xff] %v1218
    %1222 = vst [vmem:[%s1220 + $0x8] sm:$0xff] %v1219
    // Predicated region
    $region26: #{double_convolution_block.1} parent=1 // pred_check
      _
    $region27: #{double_convolution_block.1} parent=1 // pred_check_branch
      %1224 = sbr.rel (0) target = $region29
    $region28: #{double_convolution_block.1} parent=1 // pred_region
      _
    $region29: #{double_convolution_block.1} parent=1 // pred_fallthru
      _
    // Predicated region
    $region30: #{double_convolution_block.1} parent=1 // pred_check
      _
    $region31: #{double_convolution_block.1} parent=1 // pred_check_branch
      %1226 = sbr.rel (0) target = $region33
    $region32: #{double_convolution_block.1} parent=1 // pred_region
      _
    $region33: #{double_convolution_block.1} parent=1 // pred_fallthru
      _
    %1227 = vsyncpa [#allocation5], 1

</llo_original>
